<compile_context>
chip_gen: v6e
topology: v6e:2x2x1
jax: 0.10.0
libtpu: 0.0.40
codegen_flags: <defaults>
</compile_context>

<pallas_src>
import functools

import jax
import jax.numpy as jnp
from jax import lax
from jax.experimental import pallas as pl
from jax.experimental.pallas import tpu as pltpu


LN_EPS = 1e-6  # timm DeiT uses LayerNorm(eps=1e-6)


# ----------------------------- helpers -----------------------------

def _pick_tile_m(M):
    """Pick a row tile (multiple of 8) for the M grid; fall back to the full M."""
    for t in (512, 256, 128):
        if M % t == 0 and M > t:
            return t
    return M


def _erf_poly(x):
    # Abramowitz & Stegun 7.1.26 polynomial erf (|err| <= 1.5e-7) -- keeps the exact-erf
    # GELU semantics of nn.GELU while staying Mosaic-lowerable (one exp on the EUP).
    a1, a2, a3, a4, a5 = (0.254829592, -0.284496736, 1.421413741,
                          -1.453152027, 1.061405429)
    p = 0.3275911
    ax = jnp.abs(x)
    t = 1.0 / (1.0 + p * ax)
    poly = ((((a5 * t + a4) * t + a3) * t + a2) * t + a1) * t
    y = 1.0 - poly * jnp.exp(-ax * ax)
    return jnp.where(x >= 0, y, -y)


def _gelu_exactish(x):
    return 0.5 * x * (1.0 + _erf_poly(x * 0.7071067811865476))


def _layernorm_f32(x, g, b, eps):
    mu = jnp.mean(x, axis=-1, keepdims=True)
    var = jnp.mean(jnp.square(x - mu), axis=-1, keepdims=True)
    return (x - mu) * lax.rsqrt(var + eps) * g + b


# ----------------------------- Pallas kernels -----------------------------

def _linear_kernel(x_ref, w_ref, b_ref, o_ref):
    acc = jnp.dot(x_ref[...].astype(jnp.bfloat16), w_ref[...],
                  preferred_element_type=jnp.float32) + b_ref[...]
    o_ref[...] = acc.astype(o_ref.dtype)


def _ln_linear_kernel(x_ref, g_ref, bln_ref, w_ref, b_ref, o_ref, *, eps):
    # LayerNorm prologue (f32), matmul on bf16 operands with f32 accumulation.
    y = _layernorm_f32(x_ref[...].astype(jnp.float32), g_ref[...], bln_ref[...], eps)
    acc = jnp.dot(y.astype(jnp.bfloat16), w_ref[...],
                  preferred_element_type=jnp.float32) + b_ref[...]
    o_ref[...] = acc.astype(o_ref.dtype)


def _attn_block_kernel(h_ref, g_ref, bln_ref, wqkv_ref, bqkv_ref,
                       wp_ref, bp_ref, o_ref, *, heads, dh, scale, eps):
    # One batch element, all heads:
    #   out = h + proj( concat_h softmax(q_h k_h^T * scale) v_h ) with pre-LN qkv.
    x = h_ref[0].astype(jnp.float32)                                     # (S, D)
    y = _layernorm_f32(x, g_ref[...], bln_ref[...], eps)
    qkv = jnp.dot(y.astype(jnp.bfloat16), wqkv_ref[...],
                  preferred_element_type=jnp.float32) + bqkv_ref[...]    # (S, 3D)
    D = heads * dh
    outs = []
    for h in range(heads):
        # Lane-axis layout of qkv is (3, H, Dh) == timm's qkv.reshape(B,N,3,H,Dh).
        q = qkv[:, h * dh:(h + 1) * dh].astype(jnp.bfloat16)
        k = qkv[:, D + h * dh:D + (h + 1) * dh].astype(jnp.bfloat16)
        v = qkv[:, 2 * D + h * dh:2 * D + (h + 1) * dh].astype(jnp.bfloat16)
        # scores = q @ k^T * scale (contract last dims, no explicit transpose)
        s = lax.dot_general(q, k, (((1,), (1,)), ((), ())),
                            preferred_element_type=jnp.float32) * scale
        s = s - jnp.max(s, axis=-1, keepdims=True)
        p = jnp.exp(s)
        p = p * pl.reciprocal(jnp.sum(p, axis=-1, keepdims=True), approx=True)
        outs.append(jnp.dot(p.astype(jnp.bfloat16), v,
                            preferred_element_type=jnp.float32))
    attn = jnp.concatenate(outs, axis=-1).astype(jnp.bfloat16)           # (S, D)
    proj = jnp.dot(attn, wp_ref[...],
                   preferred_element_type=jnp.float32) + bp_ref[...]
    o_ref[0] = (x + proj).astype(o_ref.dtype)


def _mlp_block_kernel(h_ref, g_ref, bln_ref, w1_ref, b1_ref,
                      w2_ref, b2_ref, o_ref, *, eps):
    # out = h + fc2( gelu( fc1( LN2(h) ) ) ), all per-token -> tile over rows.
    x = h_ref[...].astype(jnp.float32)                                   # (tm, D)
    y = _layernorm_f32(x, g_ref[...], bln_ref[...], eps)
    h1 = jnp.dot(y.astype(jnp.bfloat16), w1_ref[...],
                 preferred_element_type=jnp.float32) + b1_ref[...]       # (tm, Dm)
    h1 = _gelu_exactish(h1)
    h2 = jnp.dot(h1.astype(jnp.bfloat16), w2_ref[...],
                 preferred_element_type=jnp.float32) + b2_ref[...]       # (tm, D)
    o_ref[...] = (x + h2).astype(o_ref.dtype)


# ----------------------------- Pallas wrappers -----------------------------

def linear_pallas(x, w, b, *, out_dtype=None):
    M, K = x.shape
    N = w.shape[1]
    out_dtype = out_dtype or x.dtype
    tm = _pick_tile_m(M)
    return pl.pallas_call(
        _linear_kernel,
        out_shape=jax.ShapeDtypeStruct((M, N), out_dtype),
        grid=(M // tm,),
        in_specs=[pl.BlockSpec((tm, K), lambda i: (i, 0)),
                  pl.BlockSpec((K, N), lambda i: (0, 0)),
                  pl.BlockSpec((1, N), lambda i: (0, 0))],
        out_specs=pl.BlockSpec((tm, N), lambda i: (i, 0)),
        compiler_params=pltpu.CompilerParams(dimension_semantics=("parallel",)),
    )(x, w.astype(jnp.bfloat16), b.reshape(1, N).astype(jnp.float32))


def ln_linear_pallas(x, g, bln, w, b, *, out_dtype=None, eps=LN_EPS):
    M, K = x.shape
    N = w.shape[1]
    out_dtype = out_dtype or x.dtype
    tm = _pick_tile_m(M)
    return pl.pallas_call(
        functools.partial(_ln_linear_kernel, eps=eps),
        out_shape=jax.ShapeDtypeStruct((M, N), out_dtype),
        grid=(M // tm,),
        in_specs=[pl.BlockSpec((tm, K), lambda i: (i, 0)),
                  pl.BlockSpec((1, K), lambda i: (0, 0)),
                  pl.BlockSpec((1, K), lambda i: (0, 0)),
                  pl.BlockSpec((K, N), lambda i: (0, 0)),
                  pl.BlockSpec((1, N), lambda i: (0, 0))],
        out_specs=pl.BlockSpec((tm, N), lambda i: (i, 0)),
        compiler_params=pltpu.CompilerParams(dimension_semantics=("parallel",)),
    )(x,
      g.reshape(1, K).astype(jnp.float32), bln.reshape(1, K).astype(jnp.float32),
      w.astype(jnp.bfloat16), b.reshape(1, N).astype(jnp.float32))


def attn_block_pallas(h, ln_g, ln_b, qkv_w, qkv_b, proj_w, proj_b,
                      *, heads, dh, scale, eps=LN_EPS):
    """h: (B, S, D) f32 residual stream -> (B, S, D) f32: h + Attn(LN1(h))."""
    B, S, D = h.shape
    threeD = 3 * D
    return pl.pallas_call(
        functools.partial(_attn_block_kernel, heads=heads, dh=dh, scale=scale, eps=eps),
        out_shape=jax.ShapeDtypeStruct((B, S, D), h.dtype),
        grid=(B,),
        in_specs=[pl.BlockSpec((1, S, D), lambda b: (b, 0, 0)),
                  pl.BlockSpec((1, D), lambda b: (0, 0)),
                  pl.BlockSpec((1, D), lambda b: (0, 0)),
                  pl.BlockSpec((D, threeD), lambda b: (0, 0)),
                  pl.BlockSpec((1, threeD), lambda b: (0, 0)),
                  pl.BlockSpec((D, D), lambda b: (0, 0)),
                  pl.BlockSpec((1, D), lambda b: (0, 0))],
        out_specs=pl.BlockSpec((1, S, D), lambda b: (b, 0, 0)),
        compiler_params=pltpu.CompilerParams(dimension_semantics=("parallel",)),
    )(h,
      ln_g.reshape(1, D).astype(jnp.float32), ln_b.reshape(1, D).astype(jnp.float32),
      qkv_w.astype(jnp.bfloat16), qkv_b.reshape(1, threeD).astype(jnp.float32),
      proj_w.astype(jnp.bfloat16), proj_b.reshape(1, D).astype(jnp.float32))


def mlp_block_pallas(h2d, ln_g, ln_b, w1, b1, w2, b2, *, eps=LN_EPS):
    """h2d: (M, D) f32 residual stream -> (M, D) f32: h + MLP(LN2(h))."""
    M, D = h2d.shape
    Dm = w1.shape[1]
    tm = _pick_tile_m(M)
    return pl.pallas_call(
        functools.partial(_mlp_block_kernel, eps=eps),
        out_shape=jax.ShapeDtypeStruct((M, D), h2d.dtype),
        grid=(M // tm,),
        in_specs=[pl.BlockSpec((tm, D), lambda i: (i, 0)),
                  pl.BlockSpec((1, D), lambda i: (0, 0)),
                  pl.BlockSpec((1, D), lambda i: (0, 0)),
                  pl.BlockSpec((D, Dm), lambda i: (0, 0)),
                  pl.BlockSpec((1, Dm), lambda i: (0, 0)),
                  pl.BlockSpec((Dm, D), lambda i: (0, 0)),
                  pl.BlockSpec((1, D), lambda i: (0, 0))],
        out_specs=pl.BlockSpec((tm, D), lambda i: (i, 0)),
        compiler_params=pltpu.CompilerParams(dimension_semantics=("parallel",)),
    )(h2d,
      ln_g.reshape(1, D).astype(jnp.float32), ln_b.reshape(1, D).astype(jnp.float32),
      w1.astype(jnp.bfloat16), b1.reshape(1, Dm).astype(jnp.float32),
      w2.astype(jnp.bfloat16), b2.reshape(1, D).astype(jnp.float32))


# ----------------------------- Model (DeiT-style ViT) -----------------------------

# Scaled-down deit_small_patch16_224:
#   real:  img=224, patch=16, dim=384, depth=12, heads=6, mlp_ratio=4, head->100 classes
#   small: img=16,  patch=4,  dim=32,  depth=2,  heads=2, mlp_ratio=4, head->100 classes
CFG = dict(img=16, patch=4, in_chans=3, dim=32, depth=2, heads=2, mlp_ratio=4,
           num_classes=100)


def init_params(key, cfg):
    p, C, D = cfg['patch'], cfg['in_chans'], cfg['dim']
    N = (cfg['img'] // p) ** 2
    S = N + 1
    Dm = D * cfg['mlp_ratio']
    keys = iter(jax.random.split(key, 8 + 8 * cfg['depth']))

    def nrm(shape):
        return (0.02 * jax.random.normal(next(keys), shape)).astype(jnp.float32)

    params = {
        'patch_w': nrm((C * p * p, D)),                 # Conv2d(C, D, k=p, s=p) flattened
        'patch_b': jnp.zeros((D,), jnp.float32),
        'cls': nrm((1, 1, D)),
        'pos': nrm((1, S, D)),
        'norm_g': jnp.ones((D,), jnp.float32),
        'norm_b': jnp.zeros((D,), jnp.float32),
        'head_w': nrm((D, cfg['num_classes'])),         # replaced head: Linear(D, 100)
        'head_b': jnp.zeros((cfg['num_classes'],), jnp.float32),
        'blocks': [],
    }
    for _ in range(cfg['depth']):
        params['blocks'].append({
            'ln1_g': jnp.ones((D,), jnp.float32), 'ln1_b': jnp.zeros((D,), jnp.float32),
            'qkv_w': nrm((D, 3 * D)), 'qkv_b': jnp.zeros((3 * D,), jnp.float32),
            'proj_w': nrm((D, D)), 'proj_b': jnp.zeros((D,), jnp.float32),
            'ln2_g': jnp.ones((D,), jnp.float32), 'ln2_b': jnp.zeros((D,), jnp.float32),
            'fc1_w': nrm((D, Dm)), 'fc1_b': jnp.zeros((Dm,), jnp.float32),
            'fc2_w': nrm((Dm, D)), 'fc2_b': jnp.zeros((D,), jnp.float32),
        })
    return params


def my_deit_forward(x, params, cfg):
    B, C, Himg, Wimg = x.shape
    p, D, H = cfg['patch'], cfg['dim'], cfg['heads']
    gh, gw = Himg // p, Wimg // p
    N = gh * gw
    S = N + 1
    Dh = D // H
    scale = float(Dh) ** -0.5
    nc = cfg['num_classes']

    # Patch embedding: Conv2d(C, D, kernel=p, stride=p) == unfold-to-patches + matmul.
    patches = (x.reshape(B, C, gh, p, gw, p)
                 .transpose(0, 2, 4, 1, 3, 5)          # (B, gh, gw, C, p, p)
                 .reshape(B * N, C * p * p))
    tok = linear_pallas(patches, params['patch_w'], params['patch_b'],
                        out_dtype=jnp.float32).reshape(B, N, D)

    cls = jnp.broadcast_to(params['cls'], (B, 1, D))
    h = jnp.concatenate([cls, tok], axis=1) + params['pos']              # (B, S, D) f32

    for blk in params['blocks']:
        # ---- attention sub-block: LN1 + qkv + MHSA + proj + residual, one kernel ----
        h = attn_block_pallas(h, blk['ln1_g'], blk['ln1_b'],
                              blk['qkv_w'], blk['qkv_b'],
                              blk['proj_w'], blk['proj_b'],
                              heads=H, dh=Dh, scale=scale)
        # ---- MLP sub-block: LN2 + fc1 + GELU + fc2 + residual, one kernel ----
        h = mlp_block_pallas(h.reshape(B * S, D), blk['ln2_g'], blk['ln2_b'],
                             blk['fc1_w'], blk['fc1_b'],
                             blk['fc2_w'], blk['fc2_b']).reshape(B, S, D)

    # Final LayerNorm + classifier head, fused, applied only to the CLS token
    # (LN is per-token, so this equals norm-all-then-slice). Head is padded to a
    # full 128-lane width for unmasked stores; sliced back to num_classes outside.
    cls_tok = h[:, 0]                                                    # (B, D)
    n_pad = ((nc + 127) // 128) * 128
    head_w = jnp.pad(params['head_w'], ((0, 0), (0, n_pad - nc)))
    head_b = jnp.pad(params['head_b'], ((0, n_pad - nc),))
    logits = ln_linear_pallas(cls_tok, params['norm_g'], params['norm_b'],
                              head_w, head_b, out_dtype=jnp.float32)
    return logits[:, :nc]


if __name__ == "__main__":
    cfg = CFG
    key = jax.random.PRNGKey(0)
    xkey, pkey = jax.random.split(key)

    x = jax.random.normal(xkey, (2, cfg['in_chans'], cfg['img'], cfg['img']),
                          dtype=jnp.float32)
    params = init_params(pkey, cfg)

    fwd = jax.jit(functools.partial(my_deit_forward, cfg=cfg))
    out = fwd(x, params)
    jax.block_until_ready(out)
    assert out.shape == (2, cfg['num_classes'])
    assert out.dtype == jnp.float32
    print("KERNEL_OK")
</pallas_src>

<mosaic_0001>
module attributes {stable_mosaic.version = 11 : i64} {
  func.func @_linear_kernel(%arg0: i32, %arg1: memref<32x48xf32, #tpu.memory_space<vmem>>, %arg2: memref<48x32xbf16, #tpu.memory_space<vmem>>, %arg3: memref<1x32xf32, #tpu.memory_space<vmem>>, %arg4: memref<32x32xf32, #tpu.memory_space<vmem>>) attributes {dimension_semantics = [#tpu.dimension_semantics<parallel>], iteration_bounds = array<i64: 1>, scalar_prefetch = 0 : i64, scratch_operands = 0 : i64, tpu.core_type = #tpu.core_type<tc>, window_params = [{transform_indices = @transform_0, window_bounds = array<i64: 32, 48>}, {pipeline_mode = #tpu.pipeline_mode<synchronous>, transform_indices = @transform_1, window_bounds = array<i64: 48, 32>}, {pipeline_mode = #tpu.pipeline_mode<synchronous>, transform_indices = @transform_2, window_bounds = array<i64: 1, 32>}, {transform_indices = @transform_3, window_bounds = array<i64: 32, 32>}]} {
    %c0 = arith.constant 0 : index
    %c0_0 = arith.constant 0 : index
    %0 = vector.load %arg1[%c0, %c0_0] : memref<32x48xf32, #tpu.memory_space<vmem>>, vector<32x48xf32>
    %1 = arith.truncf %0 : vector<32x48xf32> to vector<32x48xbf16>
    %c0_1 = arith.constant 0 : index
    %c0_2 = arith.constant 0 : index
    %2 = vector.load %arg2[%c0_1, %c0_2] : memref<48x32xbf16, #tpu.memory_space<vmem>>, vector<48x32xbf16>
    %cst = arith.constant dense<0.000000e+00> : vector<32x32xf32>
    %3 = tpu.matmul %1, %2, %cst {dimension_numbers = #tpu.dot_dimension_numbers<[1], [0], [0], [1], [0, 0, 1, 1], [], []>} : vector<32x48xbf16>, vector<48x32xbf16>, vector<32x32xf32> -> vector<32x32xf32>
    %c0_3 = arith.constant 0 : index
    %c0_4 = arith.constant 0 : index
    %4 = vector.load %arg3[%c0_3, %c0_4] : memref<1x32xf32, #tpu.memory_space<vmem>>, vector<1x32xf32>
    %5 = vector.broadcast %4 : vector<1x32xf32> to vector<32x32xf32>
    %6 = arith.addf %3, %5 : vector<32x32xf32>
    %c0_5 = arith.constant 0 : index
    %c0_6 = arith.constant 0 : index
    %7 = vector.load %arg4[%c0_5, %c0_6] : memref<32x32xf32, #tpu.memory_space<vmem>>, vector<32x32xf32>
    tpu.vector_store %arg4[%c0_5, %c0_6], %6 {strides = array<i32>} : memref<32x32xf32, #tpu.memory_space<vmem>>, vector<32x32xf32>,
    return
  }
  func.func @transform_0(%arg0: i32) -> (i32, i32) {
    %c0_i32 = arith.constant 0 : i32
    %c0_i32_0 = arith.constant 0 : i32
    return %arg0, %c0_i32 : i32, i32
  }
  func.func @transform_1(%arg0: i32) -> (i32, i32) {
    %c0_i32 = arith.constant 0 : i32
    %c0_i32_0 = arith.constant 0 : i32
    %c0_i32_1 = arith.constant 0 : i32
    return %c0_i32, %c0_i32_0 : i32, i32
  }
  func.func @transform_2(%arg0: i32) -> (i32, i32) {
    %c0_i32 = arith.constant 0 : i32
    %c0_i32_0 = arith.constant 0 : i32
    %c0_i32_1 = arith.constant 0 : i32
    return %c0_i32, %c0_i32_0 : i32, i32
  }
  func.func @transform_3(%arg0: i32) -> (i32, i32) {
    %c0_i32 = arith.constant 0 : i32
    %c0_i32_0 = arith.constant 0 : i32
    return %arg0, %c0_i32 : i32, i32
  }
}

module attributes {stable_mosaic.version = 11 : i64} {
  func.func @_attn_block_kernel(%arg0: i32, %arg1: memref<1x17x32xf32, #tpu.memory_space<vmem>>, %arg2: memref<1x32xf32, #tpu.memory_space<vmem>>, %arg3: memref<1x32xf32, #tpu.memory_space<vmem>>, %arg4: memref<32x96xbf16, #tpu.memory_space<vmem>>, %arg5: memref<1x96xf32, #tpu.memory_space<vmem>>, %arg6: memref<32x32xbf16, #tpu.memory_space<vmem>>, %arg7: memref<1x32xf32, #tpu.memory_space<vmem>>, %arg8: memref<1x17x32xf32, #tpu.memory_space<vmem>>) attributes {dimension_semantics = [#tpu.dimension_semantics<parallel>], iteration_bounds = array<i64: 2>, scalar_prefetch = 0 : i64, scratch_operands = 0 : i64, tpu.core_type = #tpu.core_type<tc>, window_params = [{transform_indices = @transform_0, window_bounds = array<i64: 1, 17, 32>}, {pipeline_mode = #tpu.pipeline_mode<synchronous>, transform_indices = @transform_1, window_bounds = array<i64: 1, 32>}, {pipeline_mode = #tpu.pipeline_mode<synchronous>, transform_indices = @transform_2, window_bounds = array<i64: 1, 32>}, {pipeline_mode = #tpu.pipeline_mode<synchronous>, transform_indices = @transform_3, window_bounds = array<i64: 32, 96>}, {pipeline_mode = #tpu.pipeline_mode<synchronous>, transform_indices = @transform_4, window_bounds = array<i64: 1, 96>}, {pipeline_mode = #tpu.pipeline_mode<synchronous>, transform_indices = @transform_5, window_bounds = array<i64: 32, 32>}, {pipeline_mode = #tpu.pipeline_mode<synchronous>, transform_indices = @transform_6, window_bounds = array<i64: 1, 32>}, {transform_indices = @transform_7, window_bounds = array<i64: 1, 17, 32>}]} {
    %c0 = arith.constant 0 : index
    %c0_0 = arith.constant 0 : index
    %c0_1 = arith.constant 0 : index
    %0 = vector.load %arg1[%c0, %c0_0, %c0_1] : memref<1x17x32xf32, #tpu.memory_space<vmem>>, vector<1x17x32xf32>
    %1 = vector.shape_cast %0 : vector<1x17x32xf32> to vector<17x32xf32>
    %c0_2 = arith.constant 0 : index
    %c0_3 = arith.constant 0 : index
    %2 = vector.load %arg2[%c0_2, %c0_3] : memref<1x32xf32, #tpu.memory_space<vmem>>, vector<1x32xf32>
    %c0_4 = arith.constant 0 : index
    %c0_5 = arith.constant 0 : index
    %3 = vector.load %arg3[%c0_4, %c0_5] : memref<1x32xf32, #tpu.memory_space<vmem>>, vector<1x32xf32>
    %cst = arith.constant dense<0.000000e+00> : vector<17xf32>
    %4 = vector.multi_reduction <add>, %1, %cst [1] : vector<17x32xf32> to vector<17xf32>
    %5 = vector.shape_cast %4 : vector<17xf32> to vector<17x1xf32>
    %cst_6 = arith.constant 3.200000e+01 : f32
    %6 = vector.broadcast %cst_6 : f32 to vector<17x1xf32>
    %7 = arith.divf %5, %6 : vector<17x1xf32>
    %8 = vector.broadcast %7 : vector<17x1xf32> to vector<17x32xf32>
    %9 = arith.subf %1, %8 : vector<17x32xf32>
    %10 = arith.mulf %9, %9 : vector<17x32xf32>
    %cst_7 = arith.constant dense<0.000000e+00> : vector<17xf32>
    %11 = vector.multi_reduction <add>, %10, %cst_7 [1] : vector<17x32xf32> to vector<17xf32>
    %12 = vector.shape_cast %11 : vector<17xf32> to vector<17x1xf32>
    %cst_8 = arith.constant 3.200000e+01 : f32
    %13 = vector.broadcast %cst_8 : f32 to vector<17x1xf32>
    %14 = arith.divf %12, %13 : vector<17x1xf32>
    %15 = vector.broadcast %7 : vector<17x1xf32> to vector<17x32xf32>
    %16 = arith.subf %1, %15 : vector<17x32xf32>
    %cst_9 = arith.constant 9.99999997E-7 : f32
    %17 = vector.broadcast %cst_9 : f32 to vector<17x1xf32>
    %18 = arith.addf %14, %17 : vector<17x1xf32>
    %19 = math.rsqrt %18 : vector<17x1xf32>
    %20 = vector.broadcast %19 : vector<17x1xf32> to vector<17x32xf32>
    %21 = arith.mulf %16, %20 : vector<17x32xf32>
    %22 = vector.broadcast %2 : vector<1x32xf32> to vector<17x32xf32>
    %23 = arith.mulf %21, %22 : vector<17x32xf32>
    %24 = vector.broadcast %3 : vector<1x32xf32> to vector<17x32xf32>
    %25 = arith.addf %23, %24 : vector<17x32xf32>
    %26 = arith.truncf %25 : vector<17x32xf32> to vector<17x32xbf16>
    %c0_10 = arith.constant 0 : index
    %c0_11 = arith.constant 0 : index
    %27 = vector.load %arg4[%c0_10, %c0_11] : memref<32x96xbf16, #tpu.memory_space<vmem>>, vector<32x96xbf16>
    %cst_12 = arith.constant dense<0.000000e+00> : vector<17x96xf32>
    %28 = tpu.matmul %26, %27, %cst_12 {dimension_numbers = #tpu.dot_dimension_numbers<[1], [0], [0], [1], [0, 0, 1, 1], [], []>} : vector<17x32xbf16>, vector<32x96xbf16>, vector<17x96xf32> -> vector<17x96xf32>
    %c0_13 = arith.constant 0 : index
    %c0_14 = arith.constant 0 : index
    %29 = vector.load %arg5[%c0_13, %c0_14] : memref<1x96xf32, #tpu.memory_space<vmem>>, vector<1x96xf32>
    %30 = vector.broadcast %29 : vector<1x96xf32> to vector<17x96xf32>
    %31 = arith.addf %28, %30 : vector<17x96xf32>
    %32 = vector.extract_strided_slice %31 {offsets = [0, 0], sizes = [17, 16], strides = [1, 1]} : vector<17x96xf32> to vector<17x16xf32>
    %33 = arith.truncf %32 : vector<17x16xf32> to vector<17x16xbf16>
    %34 = vector.extract_strided_slice %31 {offsets = [0, 32], sizes = [17, 16], strides = [1, 1]} : vector<17x96xf32> to vector<17x16xf32>
    %35 = arith.truncf %34 : vector<17x16xf32> to vector<17x16xbf16>
    %36 = vector.extract_strided_slice %31 {offsets = [0, 64], sizes = [17, 16], strides = [1, 1]} : vector<17x96xf32> to vector<17x16xf32>
    %37 = arith.truncf %36 : vector<17x16xf32> to vector<17x16xbf16>
    %cst_15 = arith.constant dense<0.000000e+00> : vector<17x17xf32>
    %38 = tpu.matmul %33, %35, %cst_15 {dimension_numbers = #tpu.dot_dimension_numbers<[1], [1], [0], [0], [0, 0, 1, 0], [], []>} : vector<17x16xbf16>, vector<17x16xbf16>, vector<17x17xf32> -> vector<17x17xf32>
    %cst_16 = arith.constant 2.500000e-01 : f32
    %39 = vector.broadcast %cst_16 : f32 to vector<17x17xf32>
    %40 = arith.mulf %38, %39 : vector<17x17xf32>
    %cst_17 = arith.constant dense<0xFF800000> : vector<17xf32>
    %41 = vector.multi_reduction <maximumf>, %40, %cst_17 [1] : vector<17x17xf32> to vector<17xf32>
    %42 = vector.shape_cast %41 : vector<17xf32> to vector<17x1xf32>
    %43 = vector.broadcast %42 : vector<17x1xf32> to vector<17x17xf32>
    %44 = arith.subf %40, %43 : vector<17x17xf32>
    %45 = math.exp %44 : vector<17x17xf32>
    %cst_18 = arith.constant dense<0.000000e+00> : vector<17xf32>
    %46 = vector.multi_reduction <add>, %45, %cst_18 [1] : vector<17x17xf32> to vector<17xf32>
    %47 = vector.shape_cast %46 : vector<17xf32> to vector<17x1xf32>
    %48 = tpu.reciprocal %47 {approx = true} : vector<17x1xf32> -> vector<17x1xf32>
    %49 = vector.broadcast %48 : vector<17x1xf32> to vector<17x17xf32>
    %50 = arith.mulf %45, %49 : vector<17x17xf32>
    %51 = arith.truncf %50 : vector<17x17xf32> to vector<17x17xbf16>
    %cst_19 = arith.constant dense<0.000000e+00> : vector<17x16xf32>
    %52 = tpu.matmul %51, %37, %cst_19 {dimension_numbers = #tpu.dot_dimension_numbers<[1], [0], [0], [1], [0, 0, 1, 1], [], []>} : vector<17x17xbf16>, vector<17x16xbf16>, vector<17x16xf32> -> vector<17x16xf32>
    %53 = vector.extract_strided_slice %31 {offsets = [0, 16], sizes = [17, 16], strides = [1, 1]} : vector<17x96xf32> to vector<17x16xf32>
    %54 = arith.truncf %53 : vector<17x16xf32> to vector<17x16xbf16>
    %55 = vector.extract_strided_slice %31 {offsets = [0, 48], sizes = [17, 16], strides = [1, 1]} : vector<17x96xf32> to vector<17x16xf32>
    %56 = arith.truncf %55 : vector<17x16xf32> to vector<17x16xbf16>
    %57 = vector.extract_strided_slice %31 {offsets = [0, 80], sizes = [17, 16], strides = [1, 1]} : vector<17x96xf32> to vector<17x16xf32>
    %58 = arith.truncf %57 : vector<17x16xf32> to vector<17x16xbf16>
    %cst_20 = arith.constant dense<0.000000e+00> : vector<17x17xf32>
    %59 = tpu.matmul %54, %56, %cst_20 {dimension_numbers = #tpu.dot_dimension_numbers<[1], [1], [0], [0], [0, 0, 1, 0], [], []>} : vector<17x16xbf16>, vector<17x16xbf16>, vector<17x17xf32> -> vector<17x17xf32>
    %cst_21 = arith.constant 2.500000e-01 : f32
    %60 = vector.broadcast %cst_21 : f32 to vector<17x17xf32>
    %61 = arith.mulf %59, %60 : vector<17x17xf32>
    %cst_22 = arith.constant dense<0xFF800000> : vector<17xf32>
    %62 = vector.multi_reduction <maximumf>, %61, %cst_22 [1] : vector<17x17xf32> to vector<17xf32>
    %63 = vector.shape_cast %62 : vector<17xf32> to vector<17x1xf32>
    %64 = vector.broadcast %63 : vector<17x1xf32> to vector<17x17xf32>
    %65 = arith.subf %61, %64 : vector<17x17xf32>
    %66 = math.exp %65 : vector<17x17xf32>
    %cst_23 = arith.constant dense<0.000000e+00> : vector<17xf32>
    %67 = vector.multi_reduction <add>, %66, %cst_23 [1] : vector<17x17xf32> to vector<17xf32>
    %68 = vector.shape_cast %67 : vector<17xf32> to vector<17x1xf32>
    %69 = tpu.reciprocal %68 {approx = true} : vector<17x1xf32> -> vector<17x1xf32>
    %70 = vector.broadcast %69 : vector<17x1xf32> to vector<17x17xf32>
    %71 = arith.mulf %66, %70 : vector<17x17xf32>
    %72 = arith.truncf %71 : vector<17x17xf32> to vector<17x17xbf16>
    %cst_24 = arith.constant dense<0.000000e+00> : vector<17x16xf32>
    %73 = tpu.matmul %72, %58, %cst_24 {dimension_numbers = #tpu.dot_dimension_numbers<[1], [0], [0], [1], [0, 0, 1, 1], [], []>} : vector<17x17xbf16>, vector<17x16xbf16>, vector<17x16xf32> -> vector<17x16xf32>
    %74 = tpu.concatenate %52, %73 in 1 : vector<17x16xf32>, vector<17x16xf32> -> vector<17x32xf32>
    %75 = arith.truncf %74 : vector<17x32xf32> to vector<17x32xbf16>
    %c0_25 = arith.constant 0 : index
    %c0_26 = arith.constant 0 : index
    %76 = vector.load %arg6[%c0_25, %c0_26] : memref<32x32xbf16, #tpu.memory_space<vmem>>, vector<32x32xbf16>
    %cst_27 = arith.constant dense<0.000000e+00> : vector<17x32xf32>
    %77 = tpu.matmul %75, %76, %cst_27 {dimension_numbers = #tpu.dot_dimension_numbers<[1], [0], [0], [1], [0, 0, 1, 1], [], []>} : vector<17x32xbf16>, vector<32x32xbf16>, vector<17x32xf32> -> vector<17x32xf32>
    %c0_28 = arith.constant 0 : index
    %c0_29 = arith.constant 0 : index
    %78 = vector.load %arg7[%c0_28, %c0_29] : memref<1x32xf32, #tpu.memory_space<vmem>>, vector<1x32xf32>
    %79 = vector.broadcast %78 : vector<1x32xf32> to vector<17x32xf32>
    %80 = arith.addf %77, %79 : vector<17x32xf32>
    %81 = arith.addf %1, %80 : vector<17x32xf32>
    %c0_30 = arith.constant 0 : index
    %c0_31 = arith.constant 0 : index
    %c0_32 = arith.constant 0 : index
    %82 = vector.load %arg8[%c0_30, %c0_31, %c0_32] : memref<1x17x32xf32, #tpu.memory_space<vmem>>, vector<1x17x32xf32>
    %83 = vector.shape_cast %82 : vector<1x17x32xf32> to vector<17x32xf32>
    %84 = vector.shape_cast %81 : vector<17x32xf32> to vector<1x17x32xf32>
    tpu.vector_store %arg8[%c0_30, %c0_31, %c0_32], %84 {strides = array<i32>} : memref<1x17x32xf32, #tpu.memory_space<vmem>>, vector<1x17x32xf32>,
    return
  }
  func.func @transform_0(%arg0: i32) -> (i32, i32, i32) {
    %c0_i32 = arith.constant 0 : i32
    %c0_i32_0 = arith.constant 0 : i32
    %c0_i32_1 = arith.constant 0 : i32
    return %arg0, %c0_i32, %c0_i32_0 : i32, i32, i32
  }
  func.func @transform_1(%arg0: i32) -> (i32, i32) {
    %c0_i32 = arith.constant 0 : i32
    %c0_i32_0 = arith.constant 0 : i32
    %c0_i32_1 = arith.constant 0 : i32
    return %c0_i32, %c0_i32_0 : i32, i32
  }
  func.func @transform_2(%arg0: i32) -> (i32, i32) {
    %c0_i32 = arith.constant 0 : i32
    %c0_i32_0 = arith.constant 0 : i32
    %c0_i32_1 = arith.constant 0 : i32
    return %c0_i32, %c0_i32_0 : i32, i32
  }
  func.func @transform_3(%arg0: i32) -> (i32, i32) {
    %c0_i32 = arith.constant 0 : i32
    %c0_i32_0 = arith.constant 0 : i32
    %c0_i32_1 = arith.constant 0 : i32
    return %c0_i32, %c0_i32_0 : i32, i32
  }
  func.func @transform_4(%arg0: i32) -> (i32, i32) {
    %c0_i32 = arith.constant 0 : i32
    %c0_i32_0 = arith.constant 0 : i32
    %c0_i32_1 = arith.constant 0 : i32
    return %c0_i32, %c0_i32_0 : i32, i32
  }
  func.func @transform_5(%arg0: i32) -> (i32, i32) {
    %c0_i32 = arith.constant 0 : i32
    %c0_i32_0 = arith.constant 0 : i32
    %c0_i32_1 = arith.constant 0 : i32
    return %c0_i32, %c0_i32_0 : i32, i32
  }
  func.func @transform_6(%arg0: i32) -> (i32, i32) {
    %c0_i32 = arith.constant 0 : i32
    %c0_i32_0 = arith.constant 0 : i32
    %c0_i32_1 = arith.constant 0 : i32
    return %c0_i32, %c0_i32_0 : i32, i32
  }
  func.func @transform_7(%arg0: i32) -> (i32, i32, i32) {
    %c0_i32 = arith.constant 0 : i32
    %c0_i32_0 = arith.constant 0 : i32
    %c0_i32_1 = arith.constant 0 : i32
    return %arg0, %c0_i32, %c0_i32_0 : i32, i32, i32
  }
}

module attributes {stable_mosaic.version = 11 : i64} {
  func.func @_mlp_block_kernel(%arg0: i32, %arg1: memref<34x32xf32, #tpu.memory_space<vmem>>, %arg2: memref<1x32xf32, #tpu.memory_space<vmem>>, %arg3: memref<1x32xf32, #tpu.memory_space<vmem>>, %arg4: memref<32x128xbf16, #tpu.memory_space<vmem>>, %arg5: memref<1x128xf32, #tpu.memory_space<vmem>>, %arg6: memref<128x32xbf16, #tpu.memory_space<vmem>>, %arg7: memref<1x32xf32, #tpu.memory_space<vmem>>, %arg8: memref<34x32xf32, #tpu.memory_space<vmem>>) attributes {dimension_semantics = [#tpu.dimension_semantics<parallel>], iteration_bounds = array<i64: 1>, scalar_prefetch = 0 : i64, scratch_operands = 0 : i64, tpu.core_type = #tpu.core_type<tc>, window_params = [{transform_indices = @transform_0, window_bounds = array<i64: 34, 32>}, {pipeline_mode = #tpu.pipeline_mode<synchronous>, transform_indices = @transform_1, window_bounds = array<i64: 1, 32>}, {pipeline_mode = #tpu.pipeline_mode<synchronous>, transform_indices = @transform_2, window_bounds = array<i64: 1, 32>}, {pipeline_mode = #tpu.pipeline_mode<synchronous>, transform_indices = @transform_3, window_bounds = array<i64: 32, 128>}, {pipeline_mode = #tpu.pipeline_mode<synchronous>, transform_indices = @transform_4, window_bounds = array<i64: 1, 128>}, {pipeline_mode = #tpu.pipeline_mode<synchronous>, transform_indices = @transform_5, window_bounds = array<i64: 128, 32>}, {pipeline_mode = #tpu.pipeline_mode<synchronous>, transform_indices = @transform_6, window_bounds = array<i64: 1, 32>}, {transform_indices = @transform_7, window_bounds = array<i64: 34, 32>}]} {
    %c0 = arith.constant 0 : index
    %c0_0 = arith.constant 0 : index
    %0 = vector.load %arg1[%c0, %c0_0] : memref<34x32xf32, #tpu.memory_space<vmem>>, vector<34x32xf32>
    %c0_1 = arith.constant 0 : index
    %c0_2 = arith.constant 0 : index
    %1 = vector.load %arg2[%c0_1, %c0_2] : memref<1x32xf32, #tpu.memory_space<vmem>>, vector<1x32xf32>
    %c0_3 = arith.constant 0 : index
    %c0_4 = arith.constant 0 : index
    %2 = vector.load %arg3[%c0_3, %c0_4] : memref<1x32xf32, #tpu.memory_space<vmem>>, vector<1x32xf32>
    %cst = arith.constant dense<0.000000e+00> : vector<34xf32>
    %3 = vector.multi_reduction <add>, %0, %cst [1] : vector<34x32xf32> to vector<34xf32>
    %4 = vector.shape_cast %3 : vector<34xf32> to vector<34x1xf32>
    %cst_5 = arith.constant 3.200000e+01 : f32
    %5 = vector.broadcast %cst_5 : f32 to vector<34x1xf32>
    %6 = arith.divf %4, %5 : vector<34x1xf32>
    %7 = vector.broadcast %6 : vector<34x1xf32> to vector<34x32xf32>
    %8 = arith.subf %0, %7 : vector<34x32xf32>
    %9 = arith.mulf %8, %8 : vector<34x32xf32>
    %cst_6 = arith.constant dense<0.000000e+00> : vector<34xf32>
    %10 = vector.multi_reduction <add>, %9, %cst_6 [1] : vector<34x32xf32> to vector<34xf32>
    %11 = vector.shape_cast %10 : vector<34xf32> to vector<34x1xf32>
    %cst_7 = arith.constant 3.200000e+01 : f32
    %12 = vector.broadcast %cst_7 : f32 to vector<34x1xf32>
    %13 = arith.divf %11, %12 : vector<34x1xf32>
    %14 = vector.broadcast %6 : vector<34x1xf32> to vector<34x32xf32>
    %15 = arith.subf %0, %14 : vector<34x32xf32>
    %cst_8 = arith.constant 9.99999997E-7 : f32
    %16 = vector.broadcast %cst_8 : f32 to vector<34x1xf32>
    %17 = arith.addf %13, %16 : vector<34x1xf32>
    %18 = math.rsqrt %17 : vector<34x1xf32>
    %19 = vector.broadcast %18 : vector<34x1xf32> to vector<34x32xf32>
    %20 = arith.mulf %15, %19 : vector<34x32xf32>
    %21 = vector.broadcast %1 : vector<1x32xf32> to vector<34x32xf32>
    %22 = arith.mulf %20, %21 : vector<34x32xf32>
    %23 = vector.broadcast %2 : vector<1x32xf32> to vector<34x32xf32>
    %24 = arith.addf %22, %23 : vector<34x32xf32>
    %25 = arith.truncf %24 : vector<34x32xf32> to vector<34x32xbf16>
    %c0_9 = arith.constant 0 : index
    %c0_10 = arith.constant 0 : index
    %26 = vector.load %arg4[%c0_9, %c0_10] : memref<32x128xbf16, #tpu.memory_space<vmem>>, vector<32x128xbf16>
    %cst_11 = arith.constant dense<0.000000e+00> : vector<34x128xf32>
    %27 = tpu.matmul %25, %26, %cst_11 {dimension_numbers = #tpu.dot_dimension_numbers<[1], [0], [0], [1], [0, 0, 1, 1], [], []>} : vector<34x32xbf16>, vector<32x128xbf16>, vector<34x128xf32> -> vector<34x128xf32>
    %c0_12 = arith.constant 0 : index
    %c0_13 = arith.constant 0 : index
    %28 = vector.load %arg5[%c0_12, %c0_13] : memref<1x128xf32, #tpu.memory_space<vmem>>, vector<1x128xf32>
    %29 = vector.broadcast %28 : vector<1x128xf32> to vector<34x128xf32>
    %30 = arith.addf %27, %29 : vector<34x128xf32>
    %cst_14 = arith.constant 5.000000e-01 : f32
    %31 = vector.broadcast %cst_14 : f32 to vector<34x128xf32>
    %32 = arith.mulf %31, %30 : vector<34x128xf32>
    %cst_15 = arith.constant 0.707106769 : f32
    %33 = vector.broadcast %cst_15 : f32 to vector<34x128xf32>
    %34 = arith.mulf %30, %33 : vector<34x128xf32>
    %35 = math.absf %34 : vector<34x128xf32>
    %cst_16 = arith.constant 0.327591091 : f32
    %36 = vector.broadcast %cst_16 : f32 to vector<34x128xf32>
    %37 = arith.mulf %36, %35 : vector<34x128xf32>
    %cst_17 = arith.constant 1.000000e+00 : f32
    %38 = vector.broadcast %cst_17 : f32 to vector<34x128xf32>
    %39 = arith.addf %38, %37 : vector<34x128xf32>
    %cst_18 = arith.constant 1.000000e+00 : f32
    %40 = vector.broadcast %cst_18 : f32 to vector<34x128xf32>
    %41 = arith.divf %40, %39 : vector<34x128xf32>
    %cst_19 = arith.constant 1.06140542 : f32
    %42 = vector.broadcast %cst_19 : f32 to vector<34x128xf32>
    %43 = arith.mulf %42, %41 : vector<34x128xf32>
    %cst_20 = arith.constant -1.45315206 : f32
    %44 = vector.broadcast %cst_20 : f32 to vector<34x128xf32>
    %45 = arith.addf %43, %44 : vector<34x128xf32>
    %46 = arith.mulf %45, %41 : vector<34x128xf32>
    %cst_21 = arith.constant 1.42141378 : f32
    %47 = vector.broadcast %cst_21 : f32 to vector<34x128xf32>
    %48 = arith.addf %46, %47 : vector<34x128xf32>
    %49 = arith.mulf %48, %41 : vector<34x128xf32>
    %cst_22 = arith.constant -0.284496725 : f32
    %50 = vector.broadcast %cst_22 : f32 to vector<34x128xf32>
    %51 = arith.addf %49, %50 : vector<34x128xf32>
    %52 = arith.mulf %51, %41 : vector<34x128xf32>
    %cst_23 = arith.constant 0.254829586 : f32
    %53 = vector.broadcast %cst_23 : f32 to vector<34x128xf32>
    %54 = arith.addf %52, %53 : vector<34x128xf32>
    %55 = arith.mulf %54, %41 : vector<34x128xf32>
    %cst_24 = arith.constant 0.000000e+00 : f32
    %56 = vector.broadcast %cst_24 : f32 to vector<34x128xf32>
    %57 = arith.subf %56, %35 : vector<34x128xf32>
    %58 = arith.mulf %57, %35 : vector<34x128xf32>
    %59 = math.exp %58 : vector<34x128xf32>
    %60 = arith.mulf %55, %59 : vector<34x128xf32>
    %cst_25 = arith.constant 1.000000e+00 : f32
    %61 = vector.broadcast %cst_25 : f32 to vector<34x128xf32>
    %62 = arith.subf %61, %60 : vector<34x128xf32>
    %cst_26 = arith.constant 0.000000e+00 : f32
    %63 = vector.broadcast %cst_26 : f32 to vector<34x128xf32>
    %64 = arith.cmpf oge, %34, %63 : vector<34x128xf32>
    %cst_27 = arith.constant 0.000000e+00 : f32
    %65 = vector.broadcast %cst_27 : f32 to vector<34x128xf32>
    %66 = arith.subf %65, %62 : vector<34x128xf32>
    %67 = arith.select %64, %62, %66 : vector<34x128xi1>, vector<34x128xf32>
    %cst_28 = arith.constant 1.000000e+00 : f32
    %68 = vector.broadcast %cst_28 : f32 to vector<34x128xf32>
    %69 = arith.addf %68, %67 : vector<34x128xf32>
    %70 = arith.mulf %32, %69 : vector<34x128xf32>
    %71 = arith.truncf %70 : vector<34x128xf32> to vector<34x128xbf16>
    %c0_29 = arith.constant 0 : index
    %c0_30 = arith.constant 0 : index
    %72 = vector.load %arg6[%c0_29, %c0_30] : memref<128x32xbf16, #tpu.memory_space<vmem>>, vector<128x32xbf16>
    %cst_31 = arith.constant dense<0.000000e+00> : vector<34x32xf32>
    %73 = tpu.matmul %71, %72, %cst_31 {dimension_numbers = #tpu.dot_dimension_numbers<[1], [0], [0], [1], [0, 0, 1, 1], [], []>} : vector<34x128xbf16>, vector<128x32xbf16>, vector<34x32xf32> -> vector<34x32xf32>
    %c0_32 = arith.constant 0 : index
    %c0_33 = arith.constant 0 : index
    %74 = vector.load %arg7[%c0_32, %c0_33] : memref<1x32xf32, #tpu.memory_space<vmem>>, vector<1x32xf32>
    %75 = vector.broadcast %74 : vector<1x32xf32> to vector<34x32xf32>
    %76 = arith.addf %73, %75 : vector<34x32xf32>
    %77 = arith.addf %0, %76 : vector<34x32xf32>
    %c0_34 = arith.constant 0 : index
    %c0_35 = arith.constant 0 : index
    %78 = vector.load %arg8[%c0_34, %c0_35] : memref<34x32xf32, #tpu.memory_space<vmem>>, vector<34x32xf32>
    tpu.vector_store %arg8[%c0_34, %c0_35], %77 {strides = array<i32>} : memref<34x32xf32, #tpu.memory_space<vmem>>, vector<34x32xf32>,
    return
  }
  func.func @transform_0(%arg0: i32) -> (i32, i32) {
    %c0_i32 = arith.constant 0 : i32
    %c0_i32_0 = arith.constant 0 : i32
    return %arg0, %c0_i32 : i32, i32
  }
  func.func @transform_1(%arg0: i32) -> (i32, i32) {
    %c0_i32 = arith.constant 0 : i32
    %c0_i32_0 = arith.constant 0 : i32
    %c0_i32_1 = arith.constant 0 : i32
    return %c0_i32, %c0_i32_0 : i32, i32
  }
  func.func @transform_2(%arg0: i32) -> (i32, i32) {
    %c0_i32 = arith.constant 0 : i32
    %c0_i32_0 = arith.constant 0 : i32
    %c0_i32_1 = arith.constant 0 : i32
    return %c0_i32, %c0_i32_0 : i32, i32
  }
  func.func @transform_3(%arg0: i32) -> (i32, i32) {
    %c0_i32 = arith.constant 0 : i32
    %c0_i32_0 = arith.constant 0 : i32
    %c0_i32_1 = arith.constant 0 : i32
    return %c0_i32, %c0_i32_0 : i32, i32
  }
  func.func @transform_4(%arg0: i32) -> (i32, i32) {
    %c0_i32 = arith.constant 0 : i32
    %c0_i32_0 = arith.constant 0 : i32
    %c0_i32_1 = arith.constant 0 : i32
    return %c0_i32, %c0_i32_0 : i32, i32
  }
  func.func @transform_5(%arg0: i32) -> (i32, i32) {
    %c0_i32 = arith.constant 0 : i32
    %c0_i32_0 = arith.constant 0 : i32
    %c0_i32_1 = arith.constant 0 : i32
    return %c0_i32, %c0_i32_0 : i32, i32
  }
  func.func @transform_6(%arg0: i32) -> (i32, i32) {
    %c0_i32 = arith.constant 0 : i32
    %c0_i32_0 = arith.constant 0 : i32
    %c0_i32_1 = arith.constant 0 : i32
    return %c0_i32, %c0_i32_0 : i32, i32
  }
  func.func @transform_7(%arg0: i32) -> (i32, i32) {
    %c0_i32 = arith.constant 0 : i32
    %c0_i32_0 = arith.constant 0 : i32
    return %arg0, %c0_i32 : i32, i32
  }
}

module attributes {stable_mosaic.version = 11 : i64} {
  func.func @_ln_linear_kernel(%arg0: i32, %arg1: memref<2x32xf32, #tpu.memory_space<vmem>>, %arg2: memref<1x32xf32, #tpu.memory_space<vmem>>, %arg3: memref<1x32xf32, #tpu.memory_space<vmem>>, %arg4: memref<32x128xbf16, #tpu.memory_space<vmem>>, %arg5: memref<1x128xf32, #tpu.memory_space<vmem>>, %arg6: memref<2x128xf32, #tpu.memory_space<vmem>>) attributes {dimension_semantics = [#tpu.dimension_semantics<parallel>], iteration_bounds = array<i64: 1>, scalar_prefetch = 0 : i64, scratch_operands = 0 : i64, tpu.core_type = #tpu.core_type<tc>, window_params = [{transform_indices = @transform_0, window_bounds = array<i64: 2, 32>}, {pipeline_mode = #tpu.pipeline_mode<synchronous>, transform_indices = @transform_1, window_bounds = array<i64: 1, 32>}, {pipeline_mode = #tpu.pipeline_mode<synchronous>, transform_indices = @transform_2, window_bounds = array<i64: 1, 32>}, {pipeline_mode = #tpu.pipeline_mode<synchronous>, transform_indices = @transform_3, window_bounds = array<i64: 32, 128>}, {pipeline_mode = #tpu.pipeline_mode<synchronous>, transform_indices = @transform_4, window_bounds = array<i64: 1, 128>}, {transform_indices = @transform_5, window_bounds = array<i64: 2, 128>}]} {
    %c0 = arith.constant 0 : index
    %c0_0 = arith.constant 0 : index
    %0 = vector.load %arg1[%c0, %c0_0] : memref<2x32xf32, #tpu.memory_space<vmem>>, vector<2x32xf32>
    %c0_1 = arith.constant 0 : index
    %c0_2 = arith.constant 0 : index
    %1 = vector.load %arg2[%c0_1, %c0_2] : memref<1x32xf32, #tpu.memory_space<vmem>>, vector<1x32xf32>
    %c0_3 = arith.constant 0 : index
    %c0_4 = arith.constant 0 : index
    %2 = vector.load %arg3[%c0_3, %c0_4] : memref<1x32xf32, #tpu.memory_space<vmem>>, vector<1x32xf32>
    %cst = arith.constant dense<0.000000e+00> : vector<2xf32>
    %3 = vector.multi_reduction <add>, %0, %cst [1] : vector<2x32xf32> to vector<2xf32>
    %4 = vector.shape_cast %3 : vector<2xf32> to vector<2x1xf32>
    %cst_5 = arith.constant 3.200000e+01 : f32
    %5 = vector.broadcast %cst_5 : f32 to vector<2x1xf32>
    %6 = arith.divf %4, %5 : vector<2x1xf32>
    %7 = vector.broadcast %6 : vector<2x1xf32> to vector<2x32xf32>
    %8 = arith.subf %0, %7 : vector<2x32xf32>
    %9 = arith.mulf %8, %8 : vector<2x32xf32>
    %cst_6 = arith.constant dense<0.000000e+00> : vector<2xf32>
    %10 = vector.multi_reduction <add>, %9, %cst_6 [1] : vector<2x32xf32> to vector<2xf32>
    %11 = vector.shape_cast %10 : vector<2xf32> to vector<2x1xf32>
    %cst_7 = arith.constant 3.200000e+01 : f32
    %12 = vector.broadcast %cst_7 : f32 to vector<2x1xf32>
    %13 = arith.divf %11, %12 : vector<2x1xf32>
    %14 = vector.broadcast %6 : vector<2x1xf32> to vector<2x32xf32>
    %15 = arith.subf %0, %14 : vector<2x32xf32>
    %cst_8 = arith.constant 9.99999997E-7 : f32
    %16 = vector.broadcast %cst_8 : f32 to vector<2x1xf32>
    %17 = arith.addf %13, %16 : vector<2x1xf32>
    %18 = math.rsqrt %17 : vector<2x1xf32>
    %19 = vector.broadcast %18 : vector<2x1xf32> to vector<2x32xf32>
    %20 = arith.mulf %15, %19 : vector<2x32xf32>
    %21 = vector.broadcast %1 : vector<1x32xf32> to vector<2x32xf32>
    %22 = arith.mulf %20, %21 : vector<2x32xf32>
    %23 = vector.broadcast %2 : vector<1x32xf32> to vector<2x32xf32>
    %24 = arith.addf %22, %23 : vector<2x32xf32>
    %25 = arith.truncf %24 : vector<2x32xf32> to vector<2x32xbf16>
    %c0_9 = arith.constant 0 : index
    %c0_10 = arith.constant 0 : index
    %26 = vector.load %arg4[%c0_9, %c0_10] : memref<32x128xbf16, #tpu.memory_space<vmem>>, vector<32x128xbf16>
    %cst_11 = arith.constant dense<0.000000e+00> : vector<2x128xf32>
    %27 = tpu.matmul %25, %26, %cst_11 {dimension_numbers = #tpu.dot_dimension_numbers<[1], [0], [0], [1], [0, 0, 1, 1], [], []>} : vector<2x32xbf16>, vector<32x128xbf16>, vector<2x128xf32> -> vector<2x128xf32>
    %c0_12 = arith.constant 0 : index
    %c0_13 = arith.constant 0 : index
    %28 = vector.load %arg5[%c0_12, %c0_13] : memref<1x128xf32, #tpu.memory_space<vmem>>, vector<1x128xf32>
    %29 = vector.broadcast %28 : vector<1x128xf32> to vector<2x128xf32>
    %30 = arith.addf %27, %29 : vector<2x128xf32>
    %c0_14 = arith.constant 0 : index
    %c0_15 = arith.constant 0 : index
    %31 = vector.load %arg6[%c0_14, %c0_15] : memref<2x128xf32, #tpu.memory_space<vmem>>, vector<2x128xf32>
    tpu.vector_store %arg6[%c0_14, %c0_15], %30 {strides = array<i32>} : memref<2x128xf32, #tpu.memory_space<vmem>>, vector<2x128xf32>,
    return
  }
  func.func @transform_0(%arg0: i32) -> (i32, i32) {
    %c0_i32 = arith.constant 0 : i32
    %c0_i32_0 = arith.constant 0 : i32
    return %arg0, %c0_i32 : i32, i32
  }
  func.func @transform_1(%arg0: i32) -> (i32, i32) {
    %c0_i32 = arith.constant 0 : i32
    %c0_i32_0 = arith.constant 0 : i32
    %c0_i32_1 = arith.constant 0 : i32
    return %c0_i32, %c0_i32_0 : i32, i32
  }
  func.func @transform_2(%arg0: i32) -> (i32, i32) {
    %c0_i32 = arith.constant 0 : i32
    %c0_i32_0 = arith.constant 0 : i32
    %c0_i32_1 = arith.constant 0 : i32
    return %c0_i32, %c0_i32_0 : i32, i32
  }
  func.func @transform_3(%arg0: i32) -> (i32, i32) {
    %c0_i32 = arith.constant 0 : i32
    %c0_i32_0 = arith.constant 0 : i32
    %c0_i32_1 = arith.constant 0 : i32
    return %c0_i32, %c0_i32_0 : i32, i32
  }
  func.func @transform_4(%arg0: i32) -> (i32, i32) {
    %c0_i32 = arith.constant 0 : i32
    %c0_i32_0 = arith.constant 0 : i32
    %c0_i32_1 = arith.constant 0 : i32
    return %c0_i32, %c0_i32_0 : i32, i32
  }
  func.func @transform_5(%arg0: i32) -> (i32, i32) {
    %c0_i32 = arith.constant 0 : i32
    %c0_i32_0 = arith.constant 0 : i32
    return %arg0, %c0_i32 : i32, i32
  }
}

</mosaic_0001>

<llo_original>
// kernel: my_deit_forward.6
$region0: #{my_deit_forward.6}
  #allocation0 [shape = 'u32[]', space=smem, size = 0x4, offset = 0x4, fixed_abs, tag = 'smem constant byte address 0x4 - core index']
  #allocation1 [shape = 'u32[144,128]{1,0:T(1,128)}', space=vmem, size = 0x12000, scoped, tag = 'internal scratch']
  %s0 = inlined_call_operand.vmem [shape: f32[32,48], index: 0, kind: input, shape index: {}]
  %s1 = inlined_call_operand.vmem [shape: bf16[48,32], index: 1, kind: input, shape index: {}]
  %s2 = inlined_call_operand.vmem [shape: f32[1,32], index: 2, kind: input, shape index: {}]
  %s3 = inlined_call_operand.vmem [shape: f32[32,32], index: 3, kind: output, shape index: {}]
  %s4 = sld [smem:[#allocation0]]
  $region22: #{my_deit_forward.6} parent=0
    _
  %s6 = ssub.s32 1, %s4
  %s7 = scalar_select 0, %s6, %s4
  // Predicated region
  $region2: #{my_deit_forward.6} parent=0 // pred_check
    _
  $region3: #{my_deit_forward.6} parent=0 // pred_check_branch
    %9 = sbr.rel (0) target = $region5
  $region4: #{my_deit_forward.6} parent=0 // pred_region
    _
  $region5: #{my_deit_forward.6} parent=0 // pred_fallthru
    _
  // Predicated region
  $region6: #{my_deit_forward.6} parent=0 // pred_check
    _
  $region7: #{my_deit_forward.6} parent=0 // pred_check_branch
    %11 = sbr.rel (0) target = $region9
  $region8: #{my_deit_forward.6} parent=0 // pred_region
    _
  $region9: #{my_deit_forward.6} parent=0 // pred_fallthru
    _
  // Predicated region
  $region10: #{my_deit_forward.6} parent=0 // pred_check
    _
  $region11: #{my_deit_forward.6} parent=0 // pred_check_branch
    %13 = sbr.rel (0) target = $region13
  $region12: #{my_deit_forward.6} parent=0 // pred_region
    _
  $region13: #{my_deit_forward.6} parent=0 // pred_fallthru
    _
  %v15 = vld [vmem:[%s0] sm:$0xff]
  %v16 = vld [vmem:[%s0 + $0x8] sm:$0xff]
  %v17 = vld [vmem:[%s0 + $0x10] sm:$0xff]
  %v18 = vld [vmem:[%s0 + $0x18] sm:$0xff]
  %v19 = vpack.c.bf16 %v16, %v15
  %v20 = vpack.c.bf16 %v18, %v17
  %v21 = vld [vmem:[%s1] sm:$0xf]
  %v22 = vld [vmem:[%s1 + $0x4] sm:$0xf]
  %v23 = vld [vmem:[%s1 + $0x8] sm:$0xf]
  %v24 = vld [vmem:[%s1 + $0xc] sm:$0xf]
  %v25 = vld [vmem:[%s1 + $0x10] sm:$0xf]
  %v26 = vld [vmem:[%s1 + $0x14] sm:$0xf]
  %v27 = vld [vmem:[%s2] sm:$0x1]
  %v29 = vlaneseq
  %v30 = vshrl.u32 %v29, 7
  %v31 = vsub.s32 0, %v30
  %v32 = vrot.slane %v27, %v31
  %v40 = vunpack.c.l.b16 %v21
  %v41 = vunpack.c.l.b16 %v22
  %v42 = vunpack.c.l.b16 %v23
  %v43 = vunpack.c.l.b16 %v24
  %v44 = vunpack.c.l.b16 %v25
  %v45 = vunpack.c.l.b16 %v26
  %v46 = vpack.c.b16 %v41, %v40
  %v47 = vpack.c.b16 %v43, %v42
  %v48 = vpack.c.b16 %v45, %v44
  %vm52 = vcmask 392192
  %v54 = vsel %vm52, %v19, 0
  %v57 = vsel %vm52, %v20, 0
  %59 = vmatprep.subr.bf16.mxu0 0
  %60 = vmatpush1.bf16.msra.mxu0 0
  %61 = vmatprep.subr.bf16.mxu0 0
  %62 = vmatpush1.bf16.msra.mxu0 0
  %63 = vmatprep.subr.bf16.mxu0 0
  %64 = vmatpush1.bf16.msra.mxu0 0
  %65 = vmatprep.subr.bf16.mxu0 0
  %66 = vmatpush1.bf16.msra.mxu0 0
  %67 = vmatprep.subr.bf16.mxu0 0
  %68 = vmatpush1.bf16.msra.mxu0 0
  %69 = vmatprep.subr.bf16.mxu0 0
  %70 = vmatpush1.bf16.msra.mxu0 %v48
  %71 = vmatprep.subr.bf16.mxu0 0
  %72 = vmatpush1.bf16.msra.mxu0 %v47
  %73 = vmatprep.subr.bf16.mxu0 0
  %74 = vmatpush1.bf16.msra.mxu0 %v46
  %75 = vmatprep.subr.bf16.mxu0 0
  %76 = vmatpush2.bf16.msra.mxu0 0
  %77 = vmatprep.subr.bf16.mxu0 0
  %78 = vmatpush2.bf16.msra.mxu0 0
  %79 = vmatprep.subr.bf16.mxu0 0
  %80 = vmatpush2.bf16.msra.mxu0 0
  %81 = vmatprep.subr.bf16.mxu0 0
  %82 = vmatpush2.bf16.msra.mxu0 0
  %83 = vmatprep.subr.bf16.mxu0 0
  %84 = vmatpush2.bf16.msra.mxu0 0
  %85 = vmatprep.subr.bf16.mxu0 0
  %86 = vmatpush2.bf16.msra.mxu0 0
  %87 = vmatprep.subr.bf16.mxu0 0
  %88 = vmatpush2.bf16.msra.mxu0 0
  %89 = vmatprep.subr.bf16.mxu0 0
  %90 = vmatpush2.bf16.msra.mxu0 0
  %91 = vmatprep.mubr.bf16.mxu0 0
  %92 = vmatmul.mubr.bf16.gmra.mxu0 %v54
  %v93 = vpop.f32.mrf.mxu0
  %v94 = vadd.f32 %v32, %v93
  %v95 = vpop.f32.mrf.mxu0
  %v96 = vpop.f32.mrf.mxu0
  %v97 = vadd.f32 %v32, %v96
  %v98 = vpop.f32.mrf.mxu0
  %99 = vmatprep.mubr.bf16.mxu0 0
  %100 = vmatmul.mubr.bf16.gmra.mxu0 %v57
  %v101 = vpop.f32.mrf.mxu0
  %v102 = vadd.f32 %v32, %v101
  %v103 = vpop.f32.mrf.mxu0
  %v104 = vpop.f32.mrf.mxu0
  %v105 = vadd.f32 %v32, %v104
  %v106 = vpop.f32.mrf.mxu0
  %107 = vdwg.mxu0
  %vm108 = vcmask 261120
  %109 = vst.msk [vmem:[%s3] sm:$0xff] %vm108, %v94
  %110 = vst.msk [vmem:[%s3 + $0x8] sm:$0xff] %vm108, %v97
  %111 = vst.msk [vmem:[%s3 + $0x10] sm:$0xff] %vm108, %v102
  %112 = vst.msk [vmem:[%s3 + $0x18] sm:$0xff] %vm108, %v105
  // Predicated region
  $region14: #{my_deit_forward.6} parent=0 // pred_check
    _
  $region15: #{my_deit_forward.6} parent=0 // pred_check_branch
    %114 = sbr.rel (0) target = $region17
  $region16: #{my_deit_forward.6} parent=0 // pred_region
    _
  $region17: #{my_deit_forward.6} parent=0 // pred_fallthru
    _
  // Predicated region
  $region18: #{my_deit_forward.6} parent=0 // pred_check
    _
  $region19: #{my_deit_forward.6} parent=0 // pred_check_branch
    %116 = sbr.rel (0) target = $region21
  $region20: #{my_deit_forward.6} parent=0 // pred_region
    _
  $region21: #{my_deit_forward.6} parent=0 // pred_fallthru
    _

// kernel: my_deit_forward.8
$region0: #{my_deit_forward.8}
  #allocation0 [shape = 'u32[]', space=smem, size = 0x4, offset = 0x4, fixed_abs, tag = 'smem constant byte address 0x4 - core index']
  #allocation1 [shape = 'u32[144,128]{1,0:T(1,128)}', space=vmem, size = 0x12000, scoped, tag = 'internal scratch']
  %s0 = inlined_call_operand.vmem [shape: f32[34,32], index: 0, kind: input, shape index: {}]
  %s1 = inlined_call_operand.vmem [shape: f32[1,32], index: 1, kind: input, shape index: {}]
  %s2 = inlined_call_operand.vmem [shape: f32[1,32], index: 2, kind: input, shape index: {}]
  %s3 = inlined_call_operand.vmem [shape: bf16[32,128], index: 3, kind: input, shape index: {}]
  %s4 = inlined_call_operand.vmem [shape: f32[1,128], index: 4, kind: input, shape index: {}]
  %s5 = inlined_call_operand.vmem [shape: bf16[128,32], index: 5, kind: input, shape index: {}]
  %s6 = inlined_call_operand.vmem [shape: f32[1,32], index: 6, kind: input, shape index: {}]
  %s7 = inlined_call_operand.vmem [shape: f32[34,32], index: 7, kind: output, shape index: {}]
  %s8 = sld [smem:[#allocation0]]
  $region38: #{my_deit_forward.8} parent=0
    _
  %s10 = ssub.s32 1, %s8
  %s11 = scalar_select 0, %s10, %s8
  // Predicated region
  $region2: #{my_deit_forward.8} parent=0 // pred_check
    _
  $region3: #{my_deit_forward.8} parent=0 // pred_check_branch
    %13 = sbr.rel (0) target = $region5
  $region4: #{my_deit_forward.8} parent=0 // pred_region
    _
  $region5: #{my_deit_forward.8} parent=0 // pred_fallthru
    _
  // Predicated region
  $region6: #{my_deit_forward.8} parent=0 // pred_check
    _
  $region7: #{my_deit_forward.8} parent=0 // pred_check_branch
    %15 = sbr.rel (0) target = $region9
  $region8: #{my_deit_forward.8} parent=0 // pred_region
    _
  $region9: #{my_deit_forward.8} parent=0 // pred_fallthru
    _
  // Predicated region
  $region10: #{my_deit_forward.8} parent=0 // pred_check
    _
  $region11: #{my_deit_forward.8} parent=0 // pred_check_branch
    %17 = sbr.rel (0) target = $region13
  $region12: #{my_deit_forward.8} parent=0 // pred_region
    _
  $region13: #{my_deit_forward.8} parent=0 // pred_fallthru
    _
  // Predicated region
  $region14: #{my_deit_forward.8} parent=0 // pred_check
    _
  $region15: #{my_deit_forward.8} parent=0 // pred_check_branch
    %19 = sbr.rel (0) target = $region17
  $region16: #{my_deit_forward.8} parent=0 // pred_region
    _
  $region17: #{my_deit_forward.8} parent=0 // pred_fallthru
    _
  // Predicated region
  $region18: #{my_deit_forward.8} parent=0 // pred_check
    _
  $region19: #{my_deit_forward.8} parent=0 // pred_check_branch
    %21 = sbr.rel (0) target = $region21
  $region20: #{my_deit_forward.8} parent=0 // pred_region
    _
  $region21: #{my_deit_forward.8} parent=0 // pred_fallthru
    _
  // Predicated region
  $region22: #{my_deit_forward.8} parent=0 // pred_check
    _
  $region23: #{my_deit_forward.8} parent=0 // pred_check_branch
    %23 = sbr.rel (0) target = $region25
  $region24: #{my_deit_forward.8} parent=0 // pred_region
    _
  $region25: #{my_deit_forward.8} parent=0 // pred_fallthru
    _
  // Predicated region
  $region26: #{my_deit_forward.8} parent=0 // pred_check
    _
  $region27: #{my_deit_forward.8} parent=0 // pred_check_branch
    %25 = sbr.rel (0) target = $region29
  $region28: #{my_deit_forward.8} parent=0 // pred_region
    _
  $region29: #{my_deit_forward.8} parent=0 // pred_fallthru
    _
  %v27 = vld [vmem:[%s0] sm:$0xff]
  %v28 = vld [vmem:[%s0 + $0x8] sm:$0xff]
  %v29 = vld [vmem:[%s0 + $0x10] sm:$0xff]
  %v30 = vld [vmem:[%s0 + $0x18] sm:$0xff]
  %v31 = vld [vmem:[%s0 + $0x20] sm:$0x3]
  %v32 = vld [vmem:[%s1] sm:$0x1]
  %v33 = vld [vmem:[%s2] sm:$0x1]
  %vm34 = vcmask 261120
  %v35 = vsel %vm34, %v27, 0.0
  %36 = vadd.xlane.f32.xlu0 %v35
  %v37 = vpop.xlane.xlu0 %36
  %v38 = vsel %vm34, %v28, 0.0
  %39 = vadd.xlane.f32.xlu0 %v38
  %v40 = vpop.xlane.xlu0 %39
  %v41 = vsel %vm34, %v29, 0.0
  %42 = vadd.xlane.f32.xlu0 %v41
  %v43 = vpop.xlane.xlu0 %42
  %v44 = vsel %vm34, %v30, 0.0
  %45 = vadd.xlane.f32.xlu0 %v44
  %v46 = vpop.xlane.xlu0 %45
  %vm47 = vcmask 254976
  %v48 = vsel %vm47, %v31, 0.0
  %49 = vadd.xlane.f32.xlu0 %v48
  %v50 = vpop.xlane.xlu0 %49
  %v51 = vrcp.pop 32.0
  %v52 = vmul.f32 %v37, %v51
  %v53 = vmul.f32 %v40, %v51
  %v54 = vmul.f32 %v43, %v51
  %v55 = vmul.f32 %v46, %v51
  %v56 = vmul.f32 %v50, %v51
  %v57 = vsub.f32 %v27, %v52
  %v58 = vsub.f32 %v28, %v53
  %v59 = vsub.f32 %v29, %v54
  %v60 = vsub.f32 %v30, %v55
  %v61 = vsub.f32 %v31, %v56
  %v62 = vmul.f32 %v57, %v57
  %v63 = vmul.f32 %v58, %v58
  %v64 = vmul.f32 %v59, %v59
  %v65 = vmul.f32 %v60, %v60
  %v66 = vmul.f32 %v61, %v61
  %v67 = vsel %vm34, %v62, 0.0
  %68 = vadd.xlane.f32.xlu0 %v67
  %v69 = vpop.xlane.xlu0 %68
  %v70 = vsel %vm34, %v63, 0.0
  %71 = vadd.xlane.f32.xlu0 %v70
  %v72 = vpop.xlane.xlu0 %71
  %v73 = vsel %vm34, %v64, 0.0
  %74 = vadd.xlane.f32.xlu0 %v73
  %v75 = vpop.xlane.xlu0 %74
  %v76 = vsel %vm34, %v65, 0.0
  %77 = vadd.xlane.f32.xlu0 %v76
  %v78 = vpop.xlane.xlu0 %77
  %v79 = vsel %vm47, %v66, 0.0
  %80 = vadd.xlane.f32.xlu0 %v79
  %v81 = vpop.xlane.xlu0 %80
  %v82 = vmul.f32 %v69, %v51
  %v83 = vmul.f32 %v72, %v51
  %v84 = vmul.f32 %v75, %v51
  %v85 = vmul.f32 %v78, %v51
  %v86 = vmul.f32 %v81, %v51
  %v87 = vadd.f32 %v82, 1e-06
  %v88 = vadd.f32 %v83, 1e-06
  %v89 = vadd.f32 %v84, 1e-06
  %v90 = vadd.f32 %v85, 1e-06
  %v91 = vadd.f32 %v86, 1e-06
  %v92 = vrsqrt.pop %v87
  %v93 = vrsqrt.pop %v88
  %v94 = vrsqrt.pop %v89
  %v95 = vrsqrt.pop %v90
  %v96 = vrsqrt.pop %v91
  %v97 = vmul.f32 %v57, %v92
  %v98 = vmul.f32 %v58, %v93
  %v99 = vmul.f32 %v59, %v94
  %v100 = vmul.f32 %v60, %v95
  %v101 = vmul.f32 %v61, %v96
  %v103 = vlaneseq
  %v104 = vshrl.u32 %v103, 7
  %v105 = vsub.s32 0, %v104
  %v106 = vrot.slane %v32, %v105
  %v108 = vmul.f32 %v97, %v106
  %v109 = vmul.f32 %v98, %v106
  %v110 = vmul.f32 %v99, %v106
  %v111 = vmul.f32 %v100, %v106
  %v112 = vmul.f32 %v101, %v106
  %v114 = vlaneseq
  %v115 = vshrl.u32 %v114, 7
  %v116 = vsub.s32 0, %v115
  %v117 = vrot.slane %v33, %v116
  %v119 = vadd.f32 %v108, %v117
  %v120 = vadd.f32 %v109, %v117
  %v121 = vadd.f32 %v110, %v117
  %v122 = vadd.f32 %v111, %v117
  %v123 = vadd.f32 %v112, %v117
  %v124 = vpack.c.bf16 %v120, %v119
  %v125 = vpack.c.bf16 %v122, %v121
  %v126 = vpack.c.bf16 %v123, %v123
  %v127 = vld [vmem:[%s3] sm:$0xf]
  %v128 = vld [vmem:[%s3 + $0x4] sm:$0xf]
  %v129 = vld [vmem:[%s3 + $0x8] sm:$0xf]
  %v130 = vld [vmem:[%s3 + $0xc] sm:$0xf]
  %v131 = vld [vmem:[%s4] sm:$0x1]
  %v133 = vlaneseq
  %v134 = vshrl.u32 %v133, 7
  %v135 = vsub.s32 0, %v134
  %v136 = vrot.slane %v131, %v135
  %v142 = vunpack.c.l.b16 %v127
  %v143 = vunpack.c.l.b16 %v128
  %v144 = vunpack.c.l.b16 %v129
  %v145 = vunpack.c.l.b16 %v130
  %v146 = vpack.c.b16 %v143, %v142
  %v147 = vpack.c.b16 %v145, %v144
  %v151 = vsel %vm34, %v124, 0
  %v154 = vsel %vm34, %v125, 0
  %v157 = vsel %vm34, %v126, 0
  %159 = vmatprep.subr.bf16.mxu0 0
  %160 = vmatpush1.bf16.msra.mxu0 0
  %161 = vmatprep.subr.bf16.mxu0 0
  %162 = vmatpush1.bf16.msra.mxu0 0
  %163 = vmatprep.subr.bf16.mxu0 0
  %164 = vmatpush1.bf16.msra.mxu0 0
  %165 = vmatprep.subr.bf16.mxu0 0
  %166 = vmatpush1.bf16.msra.mxu0 0
  %167 = vmatprep.subr.bf16.mxu0 0
  %168 = vmatpush1.bf16.msra.mxu0 0
  %169 = vmatprep.subr.bf16.mxu0 0
  %170 = vmatpush1.bf16.msra.mxu0 0
  %171 = vmatprep.subr.bf16.mxu0 0
  %172 = vmatpush1.bf16.msra.mxu0 %v147
  %173 = vmatprep.subr.bf16.mxu0 0
  %174 = vmatpush1.bf16.msra.mxu0 %v146
  %175 = vmatprep.subr.bf16.mxu0 0
  %176 = vmatpush2.bf16.msra.mxu0 0
  %177 = vmatprep.subr.bf16.mxu0 0
  %178 = vmatpush2.bf16.msra.mxu0 0
  %179 = vmatprep.subr.bf16.mxu0 0
  %180 = vmatpush2.bf16.msra.mxu0 0
  %181 = vmatprep.subr.bf16.mxu0 0
  %182 = vmatpush2.bf16.msra.mxu0 0
  %183 = vmatprep.subr.bf16.mxu0 0
  %184 = vmatpush2.bf16.msra.mxu0 0
  %185 = vmatprep.subr.bf16.mxu0 0
  %186 = vmatpush2.bf16.msra.mxu0 0
  %187 = vmatprep.subr.bf16.mxu0 0
  %188 = vmatpush2.bf16.msra.mxu0 0
  %189 = vmatprep.subr.bf16.mxu0 0
  %190 = vmatpush2.bf16.msra.mxu0 0
  %191 = vmatprep.mubr.bf16.mxu0 0
  %192 = vmatmul.mubr.bf16.gmra.mxu0 %v151
  %v193 = vpop.f32.mrf.mxu0
  %v194 = vadd.f32 %v136, %v193
  %v195 = vpop.f32.mrf.mxu0
  %v196 = vpop.f32.mrf.mxu0
  %v197 = vadd.f32 %v136, %v196
  %v198 = vpop.f32.mrf.mxu0
  %199 = vmatprep.mubr.bf16.mxu0 0
  %200 = vmatmul.mubr.bf16.gmra.mxu0 %v154
  %v201 = vpop.f32.mrf.mxu0
  %v202 = vadd.f32 %v136, %v201
  %v203 = vpop.f32.mrf.mxu0
  %v204 = vpop.f32.mrf.mxu0
  %v205 = vadd.f32 %v136, %v204
  %v206 = vpop.f32.mrf.mxu0
  %207 = vmatprep.mubr.bf16.mxu0 0
  %208 = vmatmul.mubr.bf16.gmra.mxu0 %v157
  %v209 = vpop.f32.mrf.mxu0
  %v210 = vadd.f32 %v136, %v209
  %v211 = vpop.f32.mrf.mxu0
  %v212 = vpop.f32.mrf.mxu0
  %v213 = vpop.f32.mrf.mxu0
  %214 = vdwg.mxu0
  %v215 = vmul.f32 %v194, 0.5
  %v216 = vmul.f32 %v197, 0.5
  %v217 = vmul.f32 %v202, 0.5
  %v218 = vmul.f32 %v205, 0.5
  %v219 = vmul.f32 %v210, 0.5
  %v220 = vmul.f32 %v194, 0.70710677
  %v221 = vmul.f32 %v197, 0.70710677
  %v222 = vmul.f32 %v202, 0.70710677
  %v223 = vmul.f32 %v205, 0.70710677
  %v224 = vmul.f32 %v210, 0.70710677
  %v225 = vand.u32 2147483647, %v220
  %v226 = vand.u32 2147483647, %v221
  %v227 = vand.u32 2147483647, %v222
  %v228 = vand.u32 2147483647, %v223
  %v229 = vand.u32 2147483647, %v224
  %v230 = vmul.f32 %v225, 0.3275911
  %v231 = vmul.f32 %v226, 0.3275911
  %v232 = vmul.f32 %v227, 0.3275911
  %v233 = vmul.f32 %v228, 0.3275911
  %v234 = vmul.f32 %v229, 0.3275911
  %v235 = vadd.f32 %v230, 1.0
  %v236 = vadd.f32 %v231, 1.0
  %v237 = vadd.f32 %v232, 1.0
  %v238 = vadd.f32 %v233, 1.0
  %v239 = vadd.f32 %v234, 1.0
  %v240 = vrcp.pop %v235
  %v241 = vmul.f32 1.0, %v240
  %v242 = vrcp.pop %v236
  %v243 = vmul.f32 1.0, %v242
  %v244 = vrcp.pop %v237
  %v245 = vmul.f32 1.0, %v244
  %v246 = vrcp.pop %v238
  %v247 = vmul.f32 1.0, %v246
  %v248 = vrcp.pop %v239
  %v249 = vmul.f32 1.0, %v248
  %v250 = vmul.f32 %v241, 1.0614054
  %v251 = vmul.f32 %v243, 1.0614054
  %v252 = vmul.f32 %v245, 1.0614054
  %v253 = vmul.f32 %v247, 1.0614054
  %v254 = vmul.f32 %v249, 1.0614054
  %v255 = vadd.f32 %v250, -1.4531521
  %v256 = vadd.f32 %v251, -1.4531521
  %v257 = vadd.f32 %v252, -1.4531521
  %v258 = vadd.f32 %v253, -1.4531521
  %v259 = vadd.f32 %v254, -1.4531521
  %v260 = vmul.f32 %v255, %v241
  %v261 = vmul.f32 %v256, %v243
  %v262 = vmul.f32 %v257, %v245
  %v263 = vmul.f32 %v258, %v247
  %v264 = vmul.f32 %v259, %v249
  %v265 = vadd.f32 %v260, 1.4214138
  %v266 = vadd.f32 %v261, 1.4214138
  %v267 = vadd.f32 %v262, 1.4214138
  %v268 = vadd.f32 %v263, 1.4214138
  %v269 = vadd.f32 %v264, 1.4214138
  %v270 = vmul.f32 %v265, %v241
  %v271 = vmul.f32 %v266, %v243
  %v272 = vmul.f32 %v267, %v245
  %v273 = vmul.f32 %v268, %v247
  %v274 = vmul.f32 %v269, %v249
  %v275 = vadd.f32 %v270, -0.28449672
  %v276 = vadd.f32 %v271, -0.28449672
  %v277 = vadd.f32 %v272, -0.28449672
  %v278 = vadd.f32 %v273, -0.28449672
  %v279 = vadd.f32 %v274, -0.28449672
  %v280 = vmul.f32 %v275, %v241
  %v281 = vmul.f32 %v276, %v243
  %v282 = vmul.f32 %v277, %v245
  %v283 = vmul.f32 %v278, %v247
  %v284 = vmul.f32 %v279, %v249
  %v285 = vadd.f32 %v280, 0.2548296
  %v286 = vadd.f32 %v281, 0.2548296
  %v287 = vadd.f32 %v282, 0.2548296
  %v288 = vadd.f32 %v283, 0.2548296
  %v289 = vadd.f32 %v284, 0.2548296
  %v290 = vmul.f32 %v285, %v241
  %v291 = vmul.f32 %v286, %v243
  %v292 = vmul.f32 %v287, %v245
  %v293 = vmul.f32 %v288, %v247
  %v294 = vmul.f32 %v289, %v249
  %v295 = vsub.f32 0.0, %v225
  %v296 = vsub.f32 0.0, %v226
  %v297 = vsub.f32 0.0, %v227
  %v298 = vsub.f32 0.0, %v228
  %v299 = vsub.f32 0.0, %v229
  %v300 = vmul.f32 %v295, %v225
  %v301 = vmul.f32 %v296, %v226
  %v302 = vmul.f32 %v297, %v227
  %v303 = vmul.f32 %v298, %v228
  %v304 = vmul.f32 %v299, %v229
  %v305 = vmul.f32 %v300, 1.442695
  %v306 = vpow.pop %v305
  %v307 = vmul.f32 %v301, 1.442695
  %v308 = vpow.pop %v307
  %v309 = vmul.f32 %v302, 1.442695
  %v310 = vpow.pop %v309
  %v311 = vmul.f32 %v303, 1.442695
  %v312 = vpow.pop %v311
  %v313 = vmul.f32 %v304, 1.442695
  %v314 = vpow.pop %v313
  %v315 = vmul.f32 %v290, %v306
  %v316 = vmul.f32 %v291, %v308
  %v317 = vmul.f32 %v292, %v310
  %v318 = vmul.f32 %v293, %v312
  %v319 = vmul.f32 %v294, %v314
  %v320 = vsub.f32 1.0, %v315
  %v321 = vsub.f32 1.0, %v316
  %v322 = vsub.f32 1.0, %v317
  %v323 = vsub.f32 1.0, %v318
  %v324 = vsub.f32 1.0, %v319
  %vm325 = vcmp.ge.f32.partialorder %v220, 0.0
  %vm326 = vcmp.ge.f32.partialorder %v221, 0.0
  %vm327 = vcmp.ge.f32.partialorder %v222, 0.0
  %vm328 = vcmp.ge.f32.partialorder %v223, 0.0
  %vm329 = vcmp.ge.f32.partialorder %v224, 0.0
  %v330 = vsub.f32 0.0, %v320
  %v331 = vsub.f32 0.0, %v321
  %v332 = vsub.f32 0.0, %v322
  %v333 = vsub.f32 0.0, %v323
  %v334 = vsub.f32 0.0, %v324
  %v335 = vsel %vm325, %v320, %v330
  %v336 = vsel %vm326, %v321, %v331
  %v337 = vsel %vm327, %v322, %v332
  %v338 = vsel %vm328, %v323, %v333
  %v339 = vsel %vm329, %v324, %v334
  %v340 = vadd.f32 %v335, 1.0
  %v341 = vadd.f32 %v336, 1.0
  %v342 = vadd.f32 %v337, 1.0
  %v343 = vadd.f32 %v338, 1.0
  %v344 = vadd.f32 %v339, 1.0
  %v345 = vmul.f32 %v215, %v340
  %v346 = vmul.f32 %v216, %v341
  %v347 = vmul.f32 %v217, %v342
  %v348 = vmul.f32 %v218, %v343
  %v349 = vmul.f32 %v219, %v344
  %v350 = vpack.c.bf16 %v346, %v345
  %v351 = vpack.c.bf16 %v348, %v347
  %v352 = vpack.c.bf16 %v349, %v349
  %v353 = vld [vmem:[%s5] sm:$0xf]
  %v354 = vld [vmem:[%s5 + $0x4] sm:$0xf]
  %v355 = vld [vmem:[%s5 + $0x8] sm:$0xf]
  %v356 = vld [vmem:[%s5 + $0xc] sm:$0xf]
  %v357 = vld [vmem:[%s5 + $0x10] sm:$0xf]
  %v358 = vld [vmem:[%s5 + $0x14] sm:$0xf]
  %v359 = vld [vmem:[%s5 + $0x18] sm:$0xf]
  %v360 = vld [vmem:[%s5 + $0x1c] sm:$0xf]
  %v361 = vld [vmem:[%s5 + $0x20] sm:$0xf]
  %v362 = vld [vmem:[%s5 + $0x24] sm:$0xf]
  %v363 = vld [vmem:[%s5 + $0x28] sm:$0xf]
  %v364 = vld [vmem:[%s5 + $0x2c] sm:$0xf]
  %v365 = vld [vmem:[%s5 + $0x30] sm:$0xf]
  %v366 = vld [vmem:[%s5 + $0x34] sm:$0xf]
  %v367 = vld [vmem:[%s5 + $0x38] sm:$0xf]
  %v368 = vld [vmem:[%s5 + $0x3c] sm:$0xf]
  %v369 = vld [vmem:[%s6] sm:$0x1]
  %v371 = vlaneseq
  %v372 = vshrl.u32 %v371, 7
  %v373 = vsub.s32 0, %v372
  %v374 = vrot.slane %v369, %v373
  %v392 = vunpack.c.l.b16 %v353
  %v393 = vunpack.c.l.b16 %v354
  %v394 = vunpack.c.l.b16 %v355
  %v395 = vunpack.c.l.b16 %v356
  %v396 = vunpack.c.l.b16 %v357
  %v397 = vunpack.c.l.b16 %v358
  %v398 = vunpack.c.l.b16 %v359
  %v399 = vunpack.c.l.b16 %v360
  %v400 = vunpack.c.l.b16 %v361
  %v401 = vunpack.c.l.b16 %v362
  %v402 = vunpack.c.l.b16 %v363
  %v403 = vunpack.c.l.b16 %v364
  %v404 = vunpack.c.l.b16 %v365
  %v405 = vunpack.c.l.b16 %v366
  %v406 = vunpack.c.l.b16 %v367
  %v407 = vunpack.c.l.b16 %v368
  %v408 = vpack.c.b16 %v393, %v392
  %v409 = vpack.c.b16 %v395, %v394
  %v410 = vpack.c.b16 %v397, %v396
  %v411 = vpack.c.b16 %v399, %v398
  %v412 = vpack.c.b16 %v401, %v400
  %v413 = vpack.c.b16 %v403, %v402
  %v414 = vpack.c.b16 %v405, %v404
  %v415 = vpack.c.b16 %v407, %v406
  %424 = vmatprep.subr.bf16.mxu0 0
  %425 = vmatpush1.bf16.msra.mxu0 %v415
  %426 = vmatprep.subr.bf16.mxu0 0
  %427 = vmatpush1.bf16.msra.mxu0 %v414
  %428 = vmatprep.subr.bf16.mxu0 0
  %429 = vmatpush1.bf16.msra.mxu0 %v413
  %430 = vmatprep.subr.bf16.mxu0 0
  %431 = vmatpush1.bf16.msra.mxu0 %v412
  %432 = vmatprep.subr.bf16.mxu0 0
  %433 = vmatpush1.bf16.msra.mxu0 %v411
  %434 = vmatprep.subr.bf16.mxu0 0
  %435 = vmatpush1.bf16.msra.mxu0 %v410
  %436 = vmatprep.subr.bf16.mxu0 0
  %437 = vmatpush1.bf16.msra.mxu0 %v409
  %438 = vmatprep.subr.bf16.mxu0 0
  %439 = vmatpush1.bf16.msra.mxu0 %v408
  %440 = vmatprep.subr.bf16.mxu0 0
  %441 = vmatpush2.bf16.msra.mxu0 0
  %442 = vmatprep.subr.bf16.mxu0 0
  %443 = vmatpush2.bf16.msra.mxu0 0
  %444 = vmatprep.subr.bf16.mxu0 0
  %445 = vmatpush2.bf16.msra.mxu0 0
  %446 = vmatprep.subr.bf16.mxu0 0
  %447 = vmatpush2.bf16.msra.mxu0 0
  %448 = vmatprep.subr.bf16.mxu0 0
  %449 = vmatpush2.bf16.msra.mxu0 0
  %450 = vmatprep.subr.bf16.mxu0 0
  %451 = vmatpush2.bf16.msra.mxu0 0
  %452 = vmatprep.subr.bf16.mxu0 0
  %453 = vmatpush2.bf16.msra.mxu0 0
  %454 = vmatprep.subr.bf16.mxu0 0
  %455 = vmatpush2.bf16.msra.mxu0 0
  %456 = vmatprep.mubr.bf16.mxu0 0
  %457 = vmatmul.mubr.bf16.gmra.mxu0 %v350
  %v458 = vpop.f32.mrf.mxu0
  %v459 = vadd.f32 %v374, %v458
  %v460 = vpop.f32.mrf.mxu0
  %v461 = vpop.f32.mrf.mxu0
  %v462 = vadd.f32 %v374, %v461
  %v463 = vpop.f32.mrf.mxu0
  %464 = vmatprep.mubr.bf16.mxu0 0
  %465 = vmatmul.mubr.bf16.gmra.mxu0 %v351
  %v466 = vpop.f32.mrf.mxu0
  %v467 = vadd.f32 %v374, %v466
  %v468 = vpop.f32.mrf.mxu0
  %v469 = vpop.f32.mrf.mxu0
  %v470 = vadd.f32 %v374, %v469
  %v471 = vpop.f32.mrf.mxu0
  %472 = vmatprep.mubr.bf16.mxu0 0
  %473 = vmatmul.mubr.bf16.gmra.mxu0 %v352
  %v474 = vpop.f32.mrf.mxu0
  %v475 = vadd.f32 %v374, %v474
  %v476 = vpop.f32.mrf.mxu0
  %v477 = vpop.f32.mrf.mxu0
  %v478 = vpop.f32.mrf.mxu0
  %479 = vdwg.mxu0
  %v480 = vadd.f32 %v27, %v459
  %v481 = vadd.f32 %v28, %v462
  %v482 = vadd.f32 %v29, %v467
  %v483 = vadd.f32 %v30, %v470
  %v484 = vadd.f32 %v31, %v475
  %485 = vst.msk [vmem:[%s7] sm:$0xff] %vm34, %v480
  %486 = vst.msk [vmem:[%s7 + $0x8] sm:$0xff] %vm34, %v481
  %487 = vst.msk [vmem:[%s7 + $0x10] sm:$0xff] %vm34, %v482
  %488 = vst.msk [vmem:[%s7 + $0x18] sm:$0xff] %vm34, %v483
  %489 = vst.msk [vmem:[%s7 + $0x20] sm:$0x3] %vm47, %v484
  // Predicated region
  $region30: #{my_deit_forward.8} parent=0 // pred_check
    _
  $region31: #{my_deit_forward.8} parent=0 // pred_check_branch
    %491 = sbr.rel (0) target = $region33
  $region32: #{my_deit_forward.8} parent=0 // pred_region
    _
  $region33: #{my_deit_forward.8} parent=0 // pred_fallthru
    _
  // Predicated region
  $region34: #{my_deit_forward.8} parent=0 // pred_check
    _
  $region35: #{my_deit_forward.8} parent=0 // pred_check_branch
    %493 = sbr.rel (0) target = $region37
  $region36: #{my_deit_forward.8} parent=0 // pred_region
    _
  $region37: #{my_deit_forward.8} parent=0 // pred_fallthru
    _

// kernel: my_deit_forward.7
$region0: #{my_deit_forward.7}
  #allocation0 [shape = 'u32[]', space=smem, size = 0x4, offset = 0x4, fixed_abs, tag = 'smem constant byte address 0x4 - core index']
  #allocation1 [shape = 'u32[144,128]{1,0:T(1,128)}', space=vmem, size = 0x12000, scoped, tag = 'internal scratch']
  %s0 = inlined_call_operand.vmem [shape: f32[2,17,32], index: 0, kind: input, shape index: {}]
  %s1 = inlined_call_operand.vmem [shape: f32[1,32], index: 1, kind: input, shape index: {}]
  %s2 = inlined_call_operand.vmem [shape: f32[1,32], index: 2, kind: input, shape index: {}]
  %s3 = inlined_call_operand.vmem [shape: bf16[32,96], index: 3, kind: input, shape index: {}]
  %s4 = inlined_call_operand.vmem [shape: f32[1,96], index: 4, kind: input, shape index: {}]
  %s5 = inlined_call_operand.vmem [shape: bf16[32,32], index: 5, kind: input, shape index: {}]
  %s6 = inlined_call_operand.vmem [shape: f32[1,32], index: 6, kind: input, shape index: {}]
  %s7 = inlined_call_operand.vmem [shape: f32[2,17,32], index: 7, kind: output, shape index: {}]
  %s8 = sld [smem:[#allocation0]]
  $region61: #{my_deit_forward.7} parent=0
    _
  %s10 = ssub.s32 1, %s8
  %s11 = scalar_select 0, %s10, %s8
  loop: start=0, step=1, limit=4
  $region2: #{my_deit_forward.7} parent=0 // loop_pre_header
    _
  $region3: #{my_deit_forward.7} parent=0 // loop_header
    %s13 = sphi 0, %s17
    %p14 = scmp.ge.s32.totalorder %s13, 4
    %s23 = sphi 0, %s25
    %s26 = sphi 0, %s23
    %s27 = sphi 0, %s26
    %s43 = sphi 0, %s27
    %s47 = sphi 0, %s47
    %s49 = sphi 0, %s47
    %s50 = sphi 0, %s49
    %s64 = sphi 0, %s50
    %s68 = sphi 0, %s68
    %s70 = sphi 0, %s68
    %s71 = sphi 0, %s70
    %s85 = sphi 0, %s71
    %s89 = sphi 0, %s89
    %s91 = sphi 0, %s89
    %s92 = sphi 0, %s91
    %s106 = sphi 0, %s92
    %s110 = sphi 0, %s110
    %s112 = sphi 0, %s110
    %s113 = sphi 0, %s112
    %s127 = sphi 0, %s113
    %s131 = sphi 0, %s131
    %s133 = sphi 0, %s131
    %s134 = sphi 0, %s133
    %s148 = sphi 0, %s134
    %s152 = sphi 0, %s152
    %s154 = sphi 0, %s152
    %s155 = sphi 0, %s154
    %s169 = sphi 0, %s155
    %s175 = sphi 0, %s177
    %s178 = sphi 0, %s175
    %s179 = sphi 0, %s178
    %s195 = sphi 0, %s179
  $region4: #{my_deit_forward.7} parent=0 // loop_header_branch
    %16 = sbr.rel (%p14) target = $region8
  $region5: #{my_deit_forward.7} parent=0 // loop_body
    %s18 = ssub.s32 %s13, 1
    %s19 = ssub.s32 %s13, 2
    %s20 = sadd.s32 %s13, 1
    %s21 = ssub.s32 %s13, %s20
    %p22 = scmp.eq.s32.totalorder %s21, 0
    %s24 = sadd.s32 %s23, 1
    %s25 = scalar_select %p22, %s23, %s24
    %p28 = pneg %p22
    %p29 = scmp.eq.s32.totalorder %s13, 1
    %p30 = por %p28, %p29
    %p31 = scmp.ne.s32.totalorder %s23, %s26
    %p32 = scmp.eq.s32.totalorder %s13, 0
    %p33 = por %p31, %p32
    %p34 = scmp.ne.s32.totalorder %s23, %s26
    %p35 = scmp.eq.s32.totalorder %s18, 1
    %p36 = por %p34, %p35
    %p37 = scmp.ne.s32.totalorder %s26, %s27
    %p38 = scmp.eq.s32.totalorder %s18, 0
    %p39 = por %p37, %p38
    %p40 = scmp.ne.s32.totalorder %s26, %s27
    %p41 = scmp.eq.s32.totalorder %s19, 1
    %p42 = por %p40, %p41
    %p44 = scmp.ne.s32.totalorder %s27, %s43
    %p45 = scmp.eq.s32.totalorder %s19, 0
    %p46 = por %p44, %p45
    %s48 = sadd.s32 %s47, 1
    %p51 = scmp.eq.s32.totalorder %s13, 1
    %p52 = scmp.ne.s32.totalorder %s47, %s49
    %p53 = scmp.eq.s32.totalorder %s13, 0
    %p54 = por %p52, %p53
    %p55 = scmp.ne.s32.totalorder %s47, %s49
    %p56 = scmp.eq.s32.totalorder %s18, 1
    %p57 = por %p55, %p56
    %p58 = scmp.ne.s32.totalorder %s49, %s50
    %p59 = scmp.eq.s32.totalorder %s18, 0
    %p60 = por %p58, %p59
    %p61 = scmp.ne.s32.totalorder %s49, %s50
    %p62 = scmp.eq.s32.totalorder %s19, 1
    %p63 = por %p61, %p62
    %p65 = scmp.ne.s32.totalorder %s50, %s64
    %p66 = scmp.eq.s32.totalorder %s19, 0
    %p67 = por %p65, %p66
    %s69 = sadd.s32 %s68, 1
    %p72 = scmp.eq.s32.totalorder %s13, 1
    %p73 = scmp.ne.s32.totalorder %s68, %s70
    %p74 = scmp.eq.s32.totalorder %s13, 0
    %p75 = por %p73, %p74
    %p76 = scmp.ne.s32.totalorder %s68, %s70
    %p77 = scmp.eq.s32.totalorder %s18, 1
    %p78 = por %p76, %p77
    %p79 = scmp.ne.s32.totalorder %s70, %s71
    %p80 = scmp.eq.s32.totalorder %s18, 0
    %p81 = por %p79, %p80
    %p82 = scmp.ne.s32.totalorder %s70, %s71
    %p83 = scmp.eq.s32.totalorder %s19, 1
    %p84 = por %p82, %p83
    %p86 = scmp.ne.s32.totalorder %s71, %s85
    %p87 = scmp.eq.s32.totalorder %s19, 0
    %p88 = por %p86, %p87
    %s90 = sadd.s32 %s89, 1
    %p93 = scmp.eq.s32.totalorder %s13, 1
    %p94 = scmp.ne.s32.totalorder %s89, %s91
    %p95 = scmp.eq.s32.totalorder %s13, 0
    %p96 = por %p94, %p95
    %p97 = scmp.ne.s32.totalorder %s89, %s91
    %p98 = scmp.eq.s32.totalorder %s18, 1
    %p99 = por %p97, %p98
    %p100 = scmp.ne.s32.totalorder %s91, %s92
    %p101 = scmp.eq.s32.totalorder %s18, 0
    %p102 = por %p100, %p101
    %p103 = scmp.ne.s32.totalorder %s91, %s92
    %p104 = scmp.eq.s32.totalorder %s19, 1
    %p105 = por %p103, %p104
    %p107 = scmp.ne.s32.totalorder %s92, %s106
    %p108 = scmp.eq.s32.totalorder %s19, 0
    %p109 = por %p107, %p108
    %s111 = sadd.s32 %s110, 1
    %p114 = scmp.eq.s32.totalorder %s13, 1
    %p115 = scmp.ne.s32.totalorder %s110, %s112
    %p116 = scmp.eq.s32.totalorder %s13, 0
    %p117 = por %p115, %p116
    %p118 = scmp.ne.s32.totalorder %s110, %s112
    %p119 = scmp.eq.s32.totalorder %s18, 1
    %p120 = por %p118, %p119
    %p121 = scmp.ne.s32.totalorder %s112, %s113
    %p122 = scmp.eq.s32.totalorder %s18, 0
    %p123 = por %p121, %p122
    %p124 = scmp.ne.s32.totalorder %s112, %s113
    %p125 = scmp.eq.s32.totalorder %s19, 1
    %p126 = por %p124, %p125
    %p128 = scmp.ne.s32.totalorder %s113, %s127
    %p129 = scmp.eq.s32.totalorder %s19, 0
    %p130 = por %p128, %p129
    %s132 = sadd.s32 %s131, 1
    %p135 = scmp.eq.s32.totalorder %s13, 1
    %p136 = scmp.ne.s32.totalorder %s131, %s133
    %p137 = scmp.eq.s32.totalorder %s13, 0
    %p138 = por %p136, %p137
    %p139 = scmp.ne.s32.totalorder %s131, %s133
    %p140 = scmp.eq.s32.totalorder %s18, 1
    %p141 = por %p139, %p140
    %p142 = scmp.ne.s32.totalorder %s133, %s134
    %p143 = scmp.eq.s32.totalorder %s18, 0
    %p144 = por %p142, %p143
    %p145 = scmp.ne.s32.totalorder %s133, %s134
    %p146 = scmp.eq.s32.totalorder %s19, 1
    %p147 = por %p145, %p146
    %p149 = scmp.ne.s32.totalorder %s134, %s148
    %p150 = scmp.eq.s32.totalorder %s19, 0
    %p151 = por %p149, %p150
    %s153 = sadd.s32 %s152, 1
    %p156 = scmp.eq.s32.totalorder %s13, 1
    %p157 = scmp.ne.s32.totalorder %s152, %s154
    %p158 = scmp.eq.s32.totalorder %s13, 0
    %p159 = por %p157, %p158
    %p160 = scmp.ne.s32.totalorder %s152, %s154
    %p161 = scmp.eq.s32.totalorder %s18, 1
    %p162 = por %p160, %p161
    %p163 = scmp.ne.s32.totalorder %s154, %s155
    %p164 = scmp.eq.s32.totalorder %s18, 0
    %p165 = por %p163, %p164
    %p166 = scmp.ne.s32.totalorder %s154, %s155
    %p167 = scmp.eq.s32.totalorder %s19, 1
    %p168 = por %p166, %p167
    %p170 = scmp.ne.s32.totalorder %s155, %s169
    %p171 = scmp.eq.s32.totalorder %s19, 0
    %p172 = por %p170, %p171
    %s173 = ssub.s32 %s13, %s20
    %p174 = scmp.eq.s32.totalorder %s173, 0
    %s176 = sadd.s32 %s175, 1
    %s177 = scalar_select %p174, %s175, %s176
    %p180 = pneg %p174
    %p181 = scmp.eq.s32.totalorder %s13, 1
    %p182 = por %p180, %p181
    %p183 = scmp.ne.s32.totalorder %s175, %s178
    %p184 = scmp.eq.s32.totalorder %s13, 0
    %p185 = por %p183, %p184
    %p186 = scmp.ne.s32.totalorder %s175, %s178
    %p187 = scmp.eq.s32.totalorder %s18, 1
    %p188 = por %p186, %p187
    %p189 = scmp.ne.s32.totalorder %s178, %s179
    %p190 = scmp.eq.s32.totalorder %s18, 0
    %p191 = por %p189, %p190
    %p192 = scmp.ne.s32.totalorder %s178, %s179
    %p193 = scmp.eq.s32.totalorder %s19, 1
    %p194 = por %p192, %p193
    %p196 = scmp.ne.s32.totalorder %s179, %s195
    %p197 = scmp.eq.s32.totalorder %s19, 0
    %p198 = por %p196, %p197
    %p199 = scmp.le.s32.totalorder 1, %s13
    %p200 = scmp.lt.s32.totalorder %s13, 3
    %p201 = pnand %p199, %p200
    %p202 = pneg %p201
    // Predicated region
    $region9: #{my_deit_forward.7} parent=5 // pred_check
      _
    $region10: #{my_deit_forward.7} parent=5 // pred_check_branch
      %204 = sbr.rel (%p201) target = $region12
    $region11: #{my_deit_forward.7} parent=5 // pred_region
      %s205 = ssub.s32 %s13, 1
      // Predicated region
      $region13: #{my_deit_forward.7} parent=11 // pred_check
        %p206 = pneg %p60
      $region14: #{my_deit_forward.7} parent=11 // pred_check_branch
        %208 = sbr.rel (%p206) target = $region16
      $region15: #{my_deit_forward.7} parent=11 // pred_region
        _
      $region16: #{my_deit_forward.7} parent=11 // pred_fallthru
        _
      // Predicated region
      $region17: #{my_deit_forward.7} parent=11 // pred_check
        %p209 = pneg %p81
      $region18: #{my_deit_forward.7} parent=11 // pred_check_branch
        %211 = sbr.rel (%p209) target = $region20
      $region19: #{my_deit_forward.7} parent=11 // pred_region
        _
      $region20: #{my_deit_forward.7} parent=11 // pred_fallthru
        _
      // Predicated region
      $region21: #{my_deit_forward.7} parent=11 // pred_check
        %p212 = pneg %p102
      $region22: #{my_deit_forward.7} parent=11 // pred_check_branch
        %214 = sbr.rel (%p212) target = $region24
      $region23: #{my_deit_forward.7} parent=11 // pred_region
        _
      $region24: #{my_deit_forward.7} parent=11 // pred_fallthru
        _
      // Predicated region
      $region25: #{my_deit_forward.7} parent=11 // pred_check
        %p215 = pneg %p123
      $region26: #{my_deit_forward.7} parent=11 // pred_check_branch
        %217 = sbr.rel (%p215) target = $region28
      $region27: #{my_deit_forward.7} parent=11 // pred_region
        _
      $region28: #{my_deit_forward.7} parent=11 // pred_fallthru
        _
      // Predicated region
      $region29: #{my_deit_forward.7} parent=11 // pred_check
        %p218 = pneg %p144
      $region30: #{my_deit_forward.7} parent=11 // pred_check_branch
        %220 = sbr.rel (%p218) target = $region32
      $region31: #{my_deit_forward.7} parent=11 // pred_region
        _
      $region32: #{my_deit_forward.7} parent=11 // pred_fallthru
        _
      // Predicated region
      $region33: #{my_deit_forward.7} parent=11 // pred_check
        %p221 = pneg %p165
      $region34: #{my_deit_forward.7} parent=11 // pred_check_branch
        %223 = sbr.rel (%p221) target = $region36
      $region35: #{my_deit_forward.7} parent=11 // pred_region
        _
      $region36: #{my_deit_forward.7} parent=11 // pred_fallthru
        _
    $region12: #{my_deit_forward.7} parent=5 // pred_fallthru
      _
    %p224 = scmp.lt.s32.totalorder %s13, 2
    // Predicated region
    $region37: #{my_deit_forward.7} parent=5 // pred_check
      %p225 = pneg %p224
    $region38: #{my_deit_forward.7} parent=5 // pred_check_branch
      %227 = sbr.rel (%p225) target = $region40
    $region39: #{my_deit_forward.7} parent=5 // pred_region
      // Predicated region
      $region41: #{my_deit_forward.7} parent=39 // pred_check
        %p228 = pneg %p33
      $region42: #{my_deit_forward.7} parent=39 // pred_check_branch
        %230 = sbr.rel (%p228) target = $region44
      $region43: #{my_deit_forward.7} parent=39 // pred_region
        %p231 = scmp.lt.s32.totalorder %s13, 1
        %s232 = scalar_select %p231, %s13, 1
        %s233 = smul.addr %s232, 3
        %s234 = smul.addr %s233, 8
        %s235 = scalar_lea.vmem %s0, %s234
      $region44: #{my_deit_forward.7} parent=39 // pred_fallthru
        _
    $region40: #{my_deit_forward.7} parent=5 // pred_fallthru
      _
    %p236 = scmp.le.s32.totalorder 1, %s13
    %p237 = scmp.lt.s32.totalorder %s13, 3
    %p238 = pnand %p236, %p237
    %p239 = pneg %p238
    // Predicated region
    $region45: #{my_deit_forward.7} parent=5 // pred_check
      _
    $region46: #{my_deit_forward.7} parent=5 // pred_check_branch
      %241 = sbr.rel (%p238) target = $region48
    $region47: #{my_deit_forward.7} parent=5 // pred_region
      %s242 = ssub.s32 %s13, 1
      %p243 = scmp.lt.s32.totalorder %s18, 1
      %s244 = scalar_select %p243, %s18, 1
      %s245 = smul.addr %s244, 3
      %s246 = smul.addr %s245, 8
      %s247 = scalar_lea.vmem %s0, %s246
      %p248 = pneg %p39
      %p249 = pneg %p36
      %p250 = pneg %p60
      %p251 = pneg %p57
      %p252 = pneg %p81
      %p253 = pneg %p78
      %p254 = pneg %p102
      %p255 = pneg %p99
      %p256 = pneg %p123
      %p257 = pneg %p120
      %p258 = pneg %p144
      %p259 = pneg %p141
      %p260 = pneg %p165
      %p261 = pneg %p162
      %p262 = pneg %p191
      %p263 = pneg %p188
      %p264 = scmp.lt.s32.totalorder %s18, 1
      %s265 = scalar_select %p264, %s18, 1
      %s266 = smul.addr %s265, 3
      %s267 = smul.addr %s266, 8
      %s268 = scalar_lea.vmem %s7, %s267
      %p269 = scmp.lt.s32.totalorder %s18, 1
      %s270 = scalar_select %p269, %s18, 1
      %s271 = smul.addr %s270, 3
      %s272 = smul.addr %s271, 8
      %s273 = scalar_lea.vmem %s0, %s272
      %p274 = scmp.lt.s32.totalorder %s18, 1
      %s275 = scalar_select %p274, %s18, 1
      %s276 = smul.addr %s275, 3
      %s277 = smul.addr %s276, 8
      %s278 = scalar_lea.vmem %s7, %s277
      %v280 = vld [vmem:[%s273] sm:$0xff]
      %v281 = vld [vmem:[%s273 + $0x8] sm:$0xff]
      %v282 = vld [vmem:[%s273 + $0x10] sm:$0x1]
      %v283 = vld [vmem:[%s1] sm:$0x1]
      %v284 = vld [vmem:[%s2] sm:$0x1]
      %vm285 = vcmask 261120
      %v286 = vsel %vm285, %v280, 0.0
      %287 = vadd.xlane.f32.xlu0 %v286
      %v288 = vpop.xlane.xlu0 %287
      %v289 = vsel %vm285, %v281, 0.0
      %290 = vadd.xlane.f32.xlu0 %v289
      %v291 = vpop.xlane.xlu0 %290
      %vm292 = vcmask 253952
      %v293 = vsel %vm292, %v282, 0.0
      %294 = vadd.xlane.f32.xlu0 %v293
      %v295 = vpop.xlane.xlu0 %294
      %v296 = vrcp.pop 32.0
      %v297 = vmul.f32 %v288, %v296
      %v298 = vmul.f32 %v291, %v296
      %v299 = vmul.f32 %v295, %v296
      %v300 = vsub.f32 %v280, %v297
      %v301 = vsub.f32 %v281, %v298
      %v302 = vsub.f32 %v282, %v299
      %v303 = vmul.f32 %v300, %v300
      %v304 = vmul.f32 %v301, %v301
      %v305 = vmul.f32 %v302, %v302
      %v306 = vsel %vm285, %v303, 0.0
      %307 = vadd.xlane.f32.xlu0 %v306
      %v308 = vpop.xlane.xlu0 %307
      %v309 = vsel %vm285, %v304, 0.0
      %310 = vadd.xlane.f32.xlu0 %v309
      %v311 = vpop.xlane.xlu0 %310
      %v312 = vsel %vm292, %v305, 0.0
      %313 = vadd.xlane.f32.xlu0 %v312
      %v314 = vpop.xlane.xlu0 %313
      %v315 = vmul.f32 %v308, %v296
      %v316 = vmul.f32 %v311, %v296
      %v317 = vmul.f32 %v314, %v296
      %v318 = vadd.f32 %v315, 1e-06
      %v319 = vadd.f32 %v316, 1e-06
      %v320 = vadd.f32 %v317, 1e-06
      %v321 = vrsqrt.pop %v318
      %v322 = vrsqrt.pop %v319
      %v323 = vrsqrt.pop %v320
      %v324 = vmul.f32 %v300, %v321
      %v325 = vmul.f32 %v301, %v322
      %v326 = vmul.f32 %v302, %v323
      %v328 = vlaneseq
      %v329 = vshrl.u32 %v328, 7
      %v330 = vsub.s32 0, %v329
      %v331 = vrot.slane %v283, %v330
      %v333 = vmul.f32 %v324, %v331
      %v334 = vmul.f32 %v325, %v331
      %v335 = vmul.f32 %v326, %v331
      %v337 = vlaneseq
      %v338 = vshrl.u32 %v337, 7
      %v339 = vsub.s32 0, %v338
      %v340 = vrot.slane %v284, %v339
      %v342 = vadd.f32 %v333, %v340
      %v343 = vadd.f32 %v334, %v340
      %v344 = vadd.f32 %v335, %v340
      %v345 = vpack.c.bf16 %v343, %v342
      %v346 = vpack.c.bf16 %v344, %v344
      %v347 = vld [vmem:[%s3] sm:$0xf]
      %v348 = vld [vmem:[%s3 + $0x4] sm:$0xf]
      %v349 = vld [vmem:[%s3 + $0x8] sm:$0xf]
      %v350 = vld [vmem:[%s3 + $0xc] sm:$0xf]
      %v351 = vld [vmem:[%s4] sm:$0x1]
      %v353 = vlaneseq
      %v354 = vshrl.u32 %v353, 7
      %v355 = vsub.s32 0, %v354
      %v356 = vrot.slane %v351, %v355
      %v362 = vunpack.c.l.b16 %v347
      %v363 = vunpack.c.l.b16 %v348
      %v364 = vunpack.c.l.b16 %v349
      %v365 = vunpack.c.l.b16 %v350
      %v366 = vpack.c.b16 %v363, %v362
      %v367 = vpack.c.b16 %v365, %v364
      %v371 = vsel %vm285, %v345, 0
      %v374 = vsel %vm285, %v346, 0
      %376 = vmatprep.subr.bf16.mxu0 0
      %377 = vmatpush1.bf16.msra.mxu0 0
      %378 = vmatprep.subr.bf16.mxu0 0
      %379 = vmatpush1.bf16.msra.mxu0 0
      %380 = vmatprep.subr.bf16.mxu0 0
      %381 = vmatpush1.bf16.msra.mxu0 0
      %382 = vmatprep.subr.bf16.mxu0 0
      %383 = vmatpush1.bf16.msra.mxu0 0
      %384 = vmatprep.subr.bf16.mxu0 0
      %385 = vmatpush1.bf16.msra.mxu0 0
      %386 = vmatprep.subr.bf16.mxu0 0
      %387 = vmatpush1.bf16.msra.mxu0 0
      %388 = vmatprep.subr.bf16.mxu0 0
      %389 = vmatpush1.bf16.msra.mxu0 %v367
      %390 = vmatprep.subr.bf16.mxu0 0
      %391 = vmatpush1.bf16.msra.mxu0 %v366
      %392 = vmatprep.subr.bf16.mxu0 0
      %393 = vmatpush2.bf16.msra.mxu0 0
      %394 = vmatprep.subr.bf16.mxu0 0
      %395 = vmatpush2.bf16.msra.mxu0 0
      %396 = vmatprep.subr.bf16.mxu0 0
      %397 = vmatpush2.bf16.msra.mxu0 0
      %398 = vmatprep.subr.bf16.mxu0 0
      %399 = vmatpush2.bf16.msra.mxu0 0
      %400 = vmatprep.subr.bf16.mxu0 0
      %401 = vmatpush2.bf16.msra.mxu0 0
      %402 = vmatprep.subr.bf16.mxu0 0
      %403 = vmatpush2.bf16.msra.mxu0 0
      %404 = vmatprep.subr.bf16.mxu0 0
      %405 = vmatpush2.bf16.msra.mxu0 0
      %406 = vmatprep.subr.bf16.mxu0 0
      %407 = vmatpush2.bf16.msra.mxu0 0
      %408 = vmatprep.mubr.bf16.mxu0 0
      %409 = vmatmul.mubr.bf16.gmra.mxu0 %v371
      %v410 = vpop.f32.mrf.mxu0
      %v411 = vadd.f32 %v356, %v410
      %v412 = vpop.f32.mrf.mxu0
      %v413 = vpop.f32.mrf.mxu0
      %v414 = vadd.f32 %v356, %v413
      %v415 = vpop.f32.mrf.mxu0
      %416 = vmatprep.mubr.bf16.mxu0 0
      %417 = vmatmul.mubr.bf16.gmra.mxu0 %v374
      %v418 = vpop.f32.mrf.mxu0
      %v419 = vadd.f32 %v356, %v418
      %v420 = vpop.f32.mrf.mxu0
      %v421 = vpop.f32.mrf.mxu0
      %v422 = vpop.f32.mrf.mxu0
      %423 = vdwg.mxu0
      %v424 = vpack.c.bf16 %v414, %v411
      %v425 = vpack.c.bf16 %v419, %v419
      %428 = vrot.lane.b32.xlu0 %v424, 96
      %v429 = vpop.permute.xlu0 %428
      %430 = vrot.lane.b32.xlu0 %v425, 96
      %v431 = vpop.permute.xlu0 %430
      %vm432 = vcmask 130048
      %v434 = vsel %vm432, %v424, 0
      %v437 = vsel %vm432, %v425, 0
      %v440 = vsel %vm432, %v429, 0
      %v443 = vsel %vm432, %v431, 0
      %445 = vmatprep.subr.bf16.mxu0 0
      %446 = vmatpush1.bf16.xpose.msra.mxu0 0
      %447 = vmatprep.subr.bf16.mxu0 0
      %448 = vmatpush1.bf16.xpose.msra.mxu0 0
      %449 = vmatprep.subr.bf16.mxu0 0
      %450 = vmatpush1.bf16.xpose.msra.mxu0 0
      %451 = vmatprep.subr.bf16.mxu0 0
      %452 = vmatpush1.bf16.xpose.msra.mxu0 0
      %453 = vmatprep.subr.bf16.mxu0 0
      %454 = vmatpush1.bf16.xpose.msra.mxu0 0
      %455 = vmatprep.subr.bf16.mxu0 0
      %456 = vmatpush1.bf16.xpose.msra.mxu0 0
      %457 = vmatprep.subr.bf16.mxu0 0
      %458 = vmatpush1.bf16.xpose.msra.mxu0 %v443
      %459 = vmatprep.subr.bf16.mxu0 0
      %460 = vmatpush1.bf16.xpose.msra.mxu0 %v440
      %461 = vmatprep.subr.bf16.mxu0 0
      %462 = vmatpush2.bf16.xpose.msra.mxu0 0
      %463 = vmatprep.subr.bf16.mxu0 0
      %464 = vmatpush2.bf16.xpose.msra.mxu0 0
      %465 = vmatprep.subr.bf16.mxu0 0
      %466 = vmatpush2.bf16.xpose.msra.mxu0 0
      %467 = vmatprep.subr.bf16.mxu0 0
      %468 = vmatpush2.bf16.xpose.msra.mxu0 0
      %469 = vmatprep.subr.bf16.mxu0 0
      %470 = vmatpush2.bf16.xpose.msra.mxu0 0
      %471 = vmatprep.subr.bf16.mxu0 0
      %472 = vmatpush2.bf16.xpose.msra.mxu0 0
      %473 = vmatprep.subr.bf16.mxu0 0
      %474 = vmatpush2.bf16.xpose.msra.mxu0 0
      %475 = vmatprep.subr.bf16.mxu0 0
      %476 = vmatpush2.bf16.xpose.msra.mxu0 0
      %477 = vmatprep.mubr.bf16.mxu0 0
      %478 = vmatmul.mubr.bf16.gmra.mxu0 %v434
      %v479 = vpop.f32.mrf.mxu0
      %v480 = vadd.f32 0.0, %v479
      %v481 = vpop.f32.mrf.mxu0
      %v482 = vpop.f32.mrf.mxu0
      %v483 = vadd.f32 0.0, %v482
      %v484 = vpop.f32.mrf.mxu0
      %485 = vmatprep.mubr.bf16.mxu0 0
      %486 = vmatmul.mubr.bf16.gmra.mxu0 %v437
      %v487 = vpop.f32.mrf.mxu0
      %v488 = vadd.f32 0.0, %v487
      %v489 = vpop.f32.mrf.mxu0
      %v490 = vpop.f32.mrf.mxu0
      %v491 = vpop.f32.mrf.mxu0
      %492 = vdwg.mxu0
      %v493 = vmul.f32 %v480, 0.25
      %v494 = vmul.f32 %v483, 0.25
      %v495 = vmul.f32 %v488, 0.25
      %vm496 = vcmask 138240
      %v497 = vsel %vm496, %v493, -inf
      %498 = vmax.xlane.f32.xlu0 %v497
      %v499 = vpop.xlane.xlu0 %498
      %v500 = vsel %vm496, %v494, -inf
      %501 = vmax.xlane.f32.xlu0 %v500
      %v502 = vpop.xlane.xlu0 %501
      %vm503 = vcmask 131072
      %v504 = vsel %vm503, %v495, -inf
      %505 = vmax.xlane.f32.xlu0 %v504
      %v506 = vpop.xlane.xlu0 %505
      %v507 = vsub.f32 %v493, %v499
      %v508 = vsub.f32 %v494, %v502
      %v509 = vsub.f32 %v495, %v506
      %v510 = vmul.f32 %v507, 1.442695
      %v511 = vpow.pop %v510
      %v512 = vmul.f32 %v508, 1.442695
      %v513 = vpow.pop %v512
      %v514 = vmul.f32 %v509, 1.442695
      %v515 = vpow.pop %v514
      %v516 = vsel %vm496, %v511, 0.0
      %517 = vadd.xlane.f32.xlu0 %v516
      %v518 = vpop.xlane.xlu0 %517
      %v519 = vsel %vm496, %v513, 0.0
      %520 = vadd.xlane.f32.xlu0 %v519
      %v521 = vpop.xlane.xlu0 %520
      %v522 = vsel %vm503, %v515, 0.0
      %523 = vadd.xlane.f32.xlu0 %v522
      %v524 = vpop.xlane.xlu0 %523
      %v525 = vrcp.pop %v518
      %v526 = vrcp.pop %v521
      %v527 = vrcp.pop %v524
      %v528 = vmul.f32 %v511, %v525
      %v529 = vmul.f32 %v513, %v526
      %v530 = vmul.f32 %v515, %v527
      %v531 = vpack.c.bf16 %v529, %v528
      %v532 = vpack.c.bf16 %v530, %v530
      %533 = vrot.lane.b32.xlu0 %v424, 64
      %v534 = vpop.permute.xlu0 %533
      %535 = vrot.lane.b32.xlu0 %v425, 64
      %v536 = vpop.permute.xlu0 %535
      %v539 = vsel %vm496, %v531, 0
      %v542 = vsel %vm496, %v532, 0
      %vm544 = vcmask 1040384
      %v545 = vsel 0, 4294967295, 65535
      %v546 = vsel %vm544, %v545, 0
      %v548 = vand.u32 %v536, %v546
      %550 = vmatprep.subr.bf16.mxu0 0
      %551 = vmatpush1.bf16.msra.mxu0 0
      %552 = vmatprep.subr.bf16.mxu0 0
      %553 = vmatpush1.bf16.msra.mxu0 0
      %554 = vmatprep.subr.bf16.mxu0 0
      %555 = vmatpush1.bf16.msra.mxu0 0
      %556 = vmatprep.subr.bf16.mxu0 0
      %557 = vmatpush1.bf16.msra.mxu0 0
      %558 = vmatprep.subr.bf16.mxu0 0
      %559 = vmatpush1.bf16.msra.mxu0 0
      %560 = vmatprep.subr.bf16.mxu0 0
      %561 = vmatpush1.bf16.msra.mxu0 0
      %562 = vmatprep.subr.bf16.mxu0 0
      %563 = vmatpush1.bf16.msra.mxu0 %v548
      %564 = vmatprep.subr.bf16.mxu0 0
      %565 = vmatpush1.bf16.msra.mxu0 %v534
      %566 = vmatprep.subr.bf16.mxu0 0
      %567 = vmatpush2.bf16.msra.mxu0 0
      %568 = vmatprep.subr.bf16.mxu0 0
      %569 = vmatpush2.bf16.msra.mxu0 0
      %570 = vmatprep.subr.bf16.mxu0 0
      %571 = vmatpush2.bf16.msra.mxu0 0
      %572 = vmatprep.subr.bf16.mxu0 0
      %573 = vmatpush2.bf16.msra.mxu0 0
      %574 = vmatprep.subr.bf16.mxu0 0
      %575 = vmatpush2.bf16.msra.mxu0 0
      %576 = vmatprep.subr.bf16.mxu0 0
      %577 = vmatpush2.bf16.msra.mxu0 0
      %578 = vmatprep.subr.bf16.mxu0 0
      %579 = vmatpush2.bf16.msra.mxu0 0
      %580 = vmatprep.subr.bf16.mxu0 0
      %581 = vmatpush2.bf16.msra.mxu0 0
      %582 = vmatprep.mubr.bf16.mxu0 0
      %583 = vmatmul.mubr.bf16.gmra.mxu0 %v539
      %v584 = vpop.f32.mrf.mxu0
      %v585 = vadd.f32 0.0, %v584
      %v586 = vpop.f32.mrf.mxu0
      %v587 = vpop.f32.mrf.mxu0
      %v588 = vadd.f32 0.0, %v587
      %v589 = vpop.f32.mrf.mxu0
      %590 = vmatprep.mubr.bf16.mxu0 0
      %591 = vmatmul.mubr.bf16.gmra.mxu0 %v542
      %v592 = vpop.f32.mrf.mxu0
      %v593 = vadd.f32 0.0, %v592
      %v594 = vpop.f32.mrf.mxu0
      %v595 = vpop.f32.mrf.mxu0
      %v596 = vpop.f32.mrf.mxu0
      %597 = vdwg.mxu0
      %598 = vrot.lane.b32.xlu0 %v424, 112
      %v599 = vpop.permute.xlu0 %598
      %600 = vrot.lane.b32.xlu0 %v425, 112
      %v601 = vpop.permute.xlu0 %600
      %602 = vrot.lane.b32.xlu0 %v424, 80
      %v603 = vpop.permute.xlu0 %602
      %604 = vrot.lane.b32.xlu0 %v425, 80
      %v605 = vpop.permute.xlu0 %604
      %v607 = vsel %vm432, %v599, 0
      %v610 = vsel %vm432, %v601, 0
      %v613 = vsel %vm432, %v603, 0
      %v616 = vsel %vm432, %v605, 0
      %618 = vmatprep.subr.bf16.mxu0 0
      %619 = vmatpush1.bf16.xpose.msra.mxu0 0
      %620 = vmatprep.subr.bf16.mxu0 0
      %621 = vmatpush1.bf16.xpose.msra.mxu0 0
      %622 = vmatprep.subr.bf16.mxu0 0
      %623 = vmatpush1.bf16.xpose.msra.mxu0 0
      %624 = vmatprep.subr.bf16.mxu0 0
      %625 = vmatpush1.bf16.xpose.msra.mxu0 0
      %626 = vmatprep.subr.bf16.mxu0 0
      %627 = vmatpush1.bf16.xpose.msra.mxu0 0
      %628 = vmatprep.subr.bf16.mxu0 0
      %629 = vmatpush1.bf16.xpose.msra.mxu0 0
      %630 = vmatprep.subr.bf16.mxu0 0
      %631 = vmatpush1.bf16.xpose.msra.mxu0 %v616
      %632 = vmatprep.subr.bf16.mxu0 0
      %633 = vmatpush1.bf16.xpose.msra.mxu0 %v613
      %634 = vmatprep.subr.bf16.mxu0 0
      %635 = vmatpush2.bf16.xpose.msra.mxu0 0
      %636 = vmatprep.subr.bf16.mxu0 0
      %637 = vmatpush2.bf16.xpose.msra.mxu0 0
      %638 = vmatprep.subr.bf16.mxu0 0
      %639 = vmatpush2.bf16.xpose.msra.mxu0 0
      %640 = vmatprep.subr.bf16.mxu0 0
      %641 = vmatpush2.bf16.xpose.msra.mxu0 0
      %642 = vmatprep.subr.bf16.mxu0 0
      %643 = vmatpush2.bf16.xpose.msra.mxu0 0
      %644 = vmatprep.subr.bf16.mxu0 0
      %645 = vmatpush2.bf16.xpose.msra.mxu0 0
      %646 = vmatprep.subr.bf16.mxu0 0
      %647 = vmatpush2.bf16.xpose.msra.mxu0 0
      %648 = vmatprep.subr.bf16.mxu0 0
      %649 = vmatpush2.bf16.xpose.msra.mxu0 0
      %650 = vmatprep.mubr.bf16.mxu0 0
      %651 = vmatmul.mubr.bf16.gmra.mxu0 %v607
      %v652 = vpop.f32.mrf.mxu0
      %v653 = vadd.f32 0.0, %v652
      %v654 = vpop.f32.mrf.mxu0
      %v655 = vpop.f32.mrf.mxu0
      %v656 = vadd.f32 0.0, %v655
      %v657 = vpop.f32.mrf.mxu0
      %658 = vmatprep.mubr.bf16.mxu0 0
      %659 = vmatmul.mubr.bf16.gmra.mxu0 %v610
      %v660 = vpop.f32.mrf.mxu0
      %v661 = vadd.f32 0.0, %v660
      %v662 = vpop.f32.mrf.mxu0
      %v663 = vpop.f32.mrf.mxu0
      %v664 = vpop.f32.mrf.mxu0
      %665 = vdwg.mxu0
      %v666 = vmul.f32 %v653, 0.25
      %v667 = vmul.f32 %v656, 0.25
      %v668 = vmul.f32 %v661, 0.25
      %v669 = vsel %vm496, %v666, -inf
      %670 = vmax.xlane.f32.xlu0 %v669
      %v671 = vpop.xlane.xlu0 %670
      %v672 = vsel %vm496, %v667, -inf
      %673 = vmax.xlane.f32.xlu0 %v672
      %v674 = vpop.xlane.xlu0 %673
      %v675 = vsel %vm503, %v668, -inf
      %676 = vmax.xlane.f32.xlu0 %v675
      %v677 = vpop.xlane.xlu0 %676
      %v678 = vsub.f32 %v666, %v671
      %v679 = vsub.f32 %v667, %v674
      %v680 = vsub.f32 %v668, %v677
      %v681 = vmul.f32 %v678, 1.442695
      %v682 = vpow.pop %v681
      %v683 = vmul.f32 %v679, 1.442695
      %v684 = vpow.pop %v683
      %v685 = vmul.f32 %v680, 1.442695
      %v686 = vpow.pop %v685
      %v687 = vsel %vm496, %v682, 0.0
      %688 = vadd.xlane.f32.xlu0 %v687
      %v689 = vpop.xlane.xlu0 %688
      %v690 = vsel %vm496, %v684, 0.0
      %691 = vadd.xlane.f32.xlu0 %v690
      %v692 = vpop.xlane.xlu0 %691
      %v693 = vsel %vm503, %v686, 0.0
      %694 = vadd.xlane.f32.xlu0 %v693
      %v695 = vpop.xlane.xlu0 %694
      %v696 = vrcp.pop %v689
      %v697 = vrcp.pop %v692
      %v698 = vrcp.pop %v695
      %v699 = vmul.f32 %v682, %v696
      %v700 = vmul.f32 %v684, %v697
      %v701 = vmul.f32 %v686, %v698
      %v702 = vpack.c.bf16 %v700, %v699
      %v703 = vpack.c.bf16 %v701, %v701
      %704 = vrot.lane.b32.xlu0 %v424, 48
      %v705 = vpop.permute.xlu0 %704
      %706 = vrot.lane.b32.xlu0 %v425, 48
      %v707 = vpop.permute.xlu0 %706
      %v710 = vsel %vm496, %v702, 0
      %v713 = vsel %vm496, %v703, 0
      %v716 = vand.u32 %v707, %v546
      %718 = vmatprep.subr.bf16.mxu0 0
      %719 = vmatpush1.bf16.msra.mxu0 0
      %720 = vmatprep.subr.bf16.mxu0 0
      %721 = vmatpush1.bf16.msra.mxu0 0
      %722 = vmatprep.subr.bf16.mxu0 0
      %723 = vmatpush1.bf16.msra.mxu0 0
      %724 = vmatprep.subr.bf16.mxu0 0
      %725 = vmatpush1.bf16.msra.mxu0 0
      %726 = vmatprep.subr.bf16.mxu0 0
      %727 = vmatpush1.bf16.msra.mxu0 0
      %728 = vmatprep.subr.bf16.mxu0 0
      %729 = vmatpush1.bf16.msra.mxu0 0
      %730 = vmatprep.subr.bf16.mxu0 0
      %731 = vmatpush1.bf16.msra.mxu0 %v716
      %732 = vmatprep.subr.bf16.mxu0 0
      %733 = vmatpush1.bf16.msra.mxu0 %v705
      %734 = vmatprep.subr.bf16.mxu0 0
      %735 = vmatpush2.bf16.msra.mxu0 0
      %736 = vmatprep.subr.bf16.mxu0 0
      %737 = vmatpush2.bf16.msra.mxu0 0
      %738 = vmatprep.subr.bf16.mxu0 0
      %739 = vmatpush2.bf16.msra.mxu0 0
      %740 = vmatprep.subr.bf16.mxu0 0
      %741 = vmatpush2.bf16.msra.mxu0 0
      %742 = vmatprep.subr.bf16.mxu0 0
      %743 = vmatpush2.bf16.msra.mxu0 0
      %744 = vmatprep.subr.bf16.mxu0 0
      %745 = vmatpush2.bf16.msra.mxu0 0
      %746 = vmatprep.subr.bf16.mxu0 0
      %747 = vmatpush2.bf16.msra.mxu0 0
      %748 = vmatprep.subr.bf16.mxu0 0
      %749 = vmatpush2.bf16.msra.mxu0 0
      %750 = vmatprep.mubr.bf16.mxu0 0
      %751 = vmatmul.mubr.bf16.gmra.mxu0 %v710
      %v752 = vpop.f32.mrf.mxu0
      %v753 = vadd.f32 0.0, %v752
      %v754 = vpop.f32.mrf.mxu0
      %v755 = vpop.f32.mrf.mxu0
      %v756 = vadd.f32 0.0, %v755
      %v757 = vpop.f32.mrf.mxu0
      %758 = vmatprep.mubr.bf16.mxu0 0
      %759 = vmatmul.mubr.bf16.gmra.mxu0 %v713
      %v760 = vpop.f32.mrf.mxu0
      %v761 = vadd.f32 0.0, %v760
      %v762 = vpop.f32.mrf.mxu0
      %v763 = vpop.f32.mrf.mxu0
      %v764 = vpop.f32.mrf.mxu0
      %765 = vdwg.mxu0
      %769 = vrot.lane.b32.xlu0 %v753, 16
      %v770 = vpop.permute.xlu0 %769
      %771 = vrot.lane.b32.xlu0 %v756, 16
      %v772 = vpop.permute.xlu0 %771
      %773 = vrot.lane.b32.xlu0 %v761, 16
      %v774 = vpop.permute.xlu0 %773
      %v778 = vsel %vm432, %v585, %v770
      %v779 = vsel %vm432, %v588, %v772
      %v780 = vsel %vm432, %v593, %v774
      %v781 = vpack.c.bf16 %v779, %v778
      %v782 = vpack.c.bf16 %v780, %v780
      %v783 = vld [vmem:[%s5] sm:$0xf]
      %v784 = vld [vmem:[%s5 + $0x4] sm:$0xf]
      %v785 = vld [vmem:[%s5 + $0x8] sm:$0xf]
      %v786 = vld [vmem:[%s5 + $0xc] sm:$0xf]
      %v787 = vld [vmem:[%s6] sm:$0x1]
      %v789 = vlaneseq
      %v790 = vshrl.u32 %v789, 7
      %v791 = vsub.s32 0, %v790
      %v792 = vrot.slane %v787, %v791
      %v798 = vunpack.c.l.b16 %v783
      %v799 = vunpack.c.l.b16 %v784
      %v800 = vunpack.c.l.b16 %v785
      %v801 = vunpack.c.l.b16 %v786
      %v802 = vpack.c.b16 %v799, %v798
      %v803 = vpack.c.b16 %v801, %v800
      %v807 = vsel %vm285, %v781, 0
      %v810 = vsel %vm285, %v782, 0
      %812 = vmatprep.subr.bf16.mxu0 0
      %813 = vmatpush1.bf16.msra.mxu0 0
      %814 = vmatprep.subr.bf16.mxu0 0
      %815 = vmatpush1.bf16.msra.mxu0 0
      %816 = vmatprep.subr.bf16.mxu0 0
      %817 = vmatpush1.bf16.msra.mxu0 0
      %818 = vmatprep.subr.bf16.mxu0 0
      %819 = vmatpush1.bf16.msra.mxu0 0
      %820 = vmatprep.subr.bf16.mxu0 0
      %821 = vmatpush1.bf16.msra.mxu0 0
      %822 = vmatprep.subr.bf16.mxu0 0
      %823 = vmatpush1.bf16.msra.mxu0 0
      %824 = vmatprep.subr.bf16.mxu0 0
      %825 = vmatpush1.bf16.msra.mxu0 %v803
      %826 = vmatprep.subr.bf16.mxu0 0
      %827 = vmatpush1.bf16.msra.mxu0 %v802
      %828 = vmatprep.subr.bf16.mxu0 0
      %829 = vmatpush2.bf16.msra.mxu0 0
      %830 = vmatprep.subr.bf16.mxu0 0
      %831 = vmatpush2.bf16.msra.mxu0 0
      %832 = vmatprep.subr.bf16.mxu0 0
      %833 = vmatpush2.bf16.msra.mxu0 0
      %834 = vmatprep.subr.bf16.mxu0 0
      %835 = vmatpush2.bf16.msra.mxu0 0
      %836 = vmatprep.subr.bf16.mxu0 0
      %837 = vmatpush2.bf16.msra.mxu0 0
      %838 = vmatprep.subr.bf16.mxu0 0
      %839 = vmatpush2.bf16.msra.mxu0 0
      %840 = vmatprep.subr.bf16.mxu0 0
      %841 = vmatpush2.bf16.msra.mxu0 0
      %842 = vmatprep.subr.bf16.mxu0 0
      %843 = vmatpush2.bf16.msra.mxu0 0
      %844 = vmatprep.mubr.bf16.mxu0 0
      %845 = vmatmul.mubr.bf16.gmra.mxu0 %v807
      %v846 = vpop.f32.mrf.mxu0
      %v847 = vadd.f32 %v792, %v846
      %v848 = vpop.f32.mrf.mxu0
      %v849 = vpop.f32.mrf.mxu0
      %v850 = vadd.f32 %v792, %v849
      %v851 = vpop.f32.mrf.mxu0
      %852 = vmatprep.mubr.bf16.mxu0 0
      %853 = vmatmul.mubr.bf16.gmra.mxu0 %v810
      %v854 = vpop.f32.mrf.mxu0
      %v855 = vadd.f32 %v792, %v854
      %v856 = vpop.f32.mrf.mxu0
      %v857 = vpop.f32.mrf.mxu0
      %v858 = vpop.f32.mrf.mxu0
      %859 = vdwg.mxu0
      %v860 = vadd.f32 %v280, %v847
      %v861 = vadd.f32 %v281, %v850
      %v862 = vadd.f32 %v282, %v855
      %863 = vst.msk [vmem:[%s278] sm:$0xff] %vm285, %v860
      %864 = vst.msk [vmem:[%s278 + $0x8] sm:$0xff] %vm285, %v861
      %865 = vst.msk [vmem:[%s278 + $0x10] sm:$0x1] %vm292, %v862
      %p866 = scmp.lt.s32.totalorder %s18, 1
      %s867 = scalar_select %p866, %s18, 1
      %s868 = smul.addr %s867, 3
      %s869 = smul.addr %s868, 8
      %s870 = scalar_lea.vmem %s7, %s869
      // Predicated region
      $region49: #{my_deit_forward.7} parent=47 // pred_check
        %p871 = pneg %p188
      $region50: #{my_deit_forward.7} parent=47 // pred_check_branch
        %873 = sbr.rel (%p871) target = $region52
      $region51: #{my_deit_forward.7} parent=47 // pred_region
        _
      $region52: #{my_deit_forward.7} parent=47 // pred_fallthru
        _
    $region48: #{my_deit_forward.7} parent=5 // pred_fallthru
      _
    %p874 = scmp.le.s32.totalorder 2, %s13
    // Predicated region
    $region53: #{my_deit_forward.7} parent=5 // pred_check
      %p875 = pneg %p874
    $region54: #{my_deit_forward.7} parent=5 // pred_check_branch
      %877 = sbr.rel (%p875) target = $region56
    $region55: #{my_deit_forward.7} parent=5 // pred_region
      %s878 = ssub.s32 %s13, 2
      // Predicated region
      $region57: #{my_deit_forward.7} parent=55 // pred_check
        %p879 = pneg %p194
      $region58: #{my_deit_forward.7} parent=55 // pred_check_branch
        %881 = sbr.rel (%p879) target = $region60
      $region59: #{my_deit_forward.7} parent=55 // pred_region
        %p882 = scmp.lt.s32.totalorder %s19, 1
        %s883 = scalar_select %p882, %s19, 1
        %s884 = smul.addr %s883, 3
        %s885 = smul.addr %s884, 8
        %s886 = scalar_lea.vmem %s7, %s885
      $region60: #{my_deit_forward.7} parent=55 // pred_fallthru
        _
    $region56: #{my_deit_forward.7} parent=5 // pred_fallthru
      _
  $region6: #{my_deit_forward.7} parent=0 // loop_footer
    %s17 = sadd.s32 1, %s13
  $region7: #{my_deit_forward.7} parent=0 // loop_footer_branch
    %12 = sbr.rel target = $region3
  $region8: #{my_deit_forward.7} parent=0 // loop_exit
    _

// kernel: my_deit_forward.11
$region0: #{my_deit_forward.11}
  #allocation0 [shape = 'u32[]', space=smem, size = 0x4, offset = 0x4, fixed_abs, tag = 'smem constant byte address 0x4 - core index']
  #allocation1 [shape = 'u32[144,128]{1,0:T(1,128)}', space=vmem, size = 0x12000, scoped, tag = 'internal scratch']
  %s0 = inlined_call_operand.vmem [shape: f32[2,32], index: 0, kind: input, shape index: {}]
  %s1 = inlined_call_operand.vmem [shape: f32[1,32], index: 1, kind: input, shape index: {}]
  %s2 = inlined_call_operand.vmem [shape: f32[1,32], index: 2, kind: input, shape index: {}]
  %s3 = inlined_call_operand.vmem [shape: bf16[32,128], index: 3, kind: input, shape index: {}]
  %s4 = inlined_call_operand.vmem [shape: f32[1,128], index: 4, kind: input, shape index: {}]
  %s5 = inlined_call_operand.hbm [shape: f32[2,128], index: 5, kind: output, shape index: {}]
  %s6 = sld [smem:[#allocation0]]
  $region30: #{my_deit_forward.11} parent=0
    _
  %s8 = ssub.s32 1, %s6
  %s9 = scalar_select 0, %s8, %s6
  $region1: #{my_deit_forward.11} parent=0
    #allocation2 [shape = 'u8[1024]{0}', space=vmem, size = 0x400, scoped, tag = 'output window, operand 0, single buffered']
    #allocation3 [shape = 's32[1]{0}', space=sflag, size = 0x4, scoped, tag = 'scoped memory for my_deit_forward.11']
    %10 = vsyncpa [#allocation3], 0
    // Predicated region
    $region2: #{my_deit_forward.11} parent=1 // pred_check
      _
    $region3: #{my_deit_forward.11} parent=1 // pred_check_branch
      %12 = sbr.rel (0) target = $region5
    $region4: #{my_deit_forward.11} parent=1 // pred_region
      _
    $region5: #{my_deit_forward.11} parent=1 // pred_fallthru
      _
    // Predicated region
    $region6: #{my_deit_forward.11} parent=1 // pred_check
      _
    $region7: #{my_deit_forward.11} parent=1 // pred_check_branch
      %14 = sbr.rel (0) target = $region9
    $region8: #{my_deit_forward.11} parent=1 // pred_region
      _
    $region9: #{my_deit_forward.11} parent=1 // pred_fallthru
      _
    // Predicated region
    $region10: #{my_deit_forward.11} parent=1 // pred_check
      _
    $region11: #{my_deit_forward.11} parent=1 // pred_check_branch
      %16 = sbr.rel (0) target = $region13
    $region12: #{my_deit_forward.11} parent=1 // pred_region
      _
    $region13: #{my_deit_forward.11} parent=1 // pred_fallthru
      _
    // Predicated region
    $region14: #{my_deit_forward.11} parent=1 // pred_check
      _
    $region15: #{my_deit_forward.11} parent=1 // pred_check_branch
      %18 = sbr.rel (0) target = $region17
    $region16: #{my_deit_forward.11} parent=1 // pred_region
      _
    $region17: #{my_deit_forward.11} parent=1 // pred_fallthru
      _
    // Predicated region
    $region18: #{my_deit_forward.11} parent=1 // pred_check
      _
    $region19: #{my_deit_forward.11} parent=1 // pred_check_branch
      %20 = sbr.rel (0) target = $region21
    $region20: #{my_deit_forward.11} parent=1 // pred_region
      _
    $region21: #{my_deit_forward.11} parent=1 // pred_fallthru
      _
    %v22 = vld [vmem:[%s0] sm:$0x3]
    %v23 = vld [vmem:[%s1] sm:$0x1]
    %v24 = vld [vmem:[%s2] sm:$0x1]
    %vm25 = vcmask 254976
    %v26 = vsel %vm25, %v22, 0.0
    %27 = vadd.xlane.f32.xlu0 %v26
    %v28 = vpop.xlane.xlu0 %27
    %v29 = vrcp.pop 32.0
    %v30 = vmul.f32 %v28, %v29
    %v31 = vsub.f32 %v22, %v30
    %v32 = vmul.f32 %v31, %v31
    %v33 = vsel %vm25, %v32, 0.0
    %34 = vadd.xlane.f32.xlu0 %v33
    %v35 = vpop.xlane.xlu0 %34
    %v36 = vmul.f32 %v35, %v29
    %v37 = vadd.f32 %v36, 1e-06
    %v38 = vrsqrt.pop %v37
    %v39 = vmul.f32 %v31, %v38
    %v41 = vlaneseq
    %v42 = vshrl.u32 %v41, 7
    %v43 = vsub.s32 0, %v42
    %v44 = vrot.slane %v23, %v43
    %v46 = vmul.f32 %v39, %v44
    %v48 = vlaneseq
    %v49 = vshrl.u32 %v48, 7
    %v50 = vsub.s32 0, %v49
    %v51 = vrot.slane %v24, %v50
    %v53 = vadd.f32 %v46, %v51
    %v54 = vpack.c.bf16 %v53, %v53
    %v55 = vld [vmem:[%s3] sm:$0xf]
    %v56 = vld [vmem:[%s3 + $0x4] sm:$0xf]
    %v57 = vld [vmem:[%s3 + $0x8] sm:$0xf]
    %v58 = vld [vmem:[%s3 + $0xc] sm:$0xf]
    %v59 = vld [vmem:[%s4] sm:$0x1]
    %v61 = vlaneseq
    %v62 = vshrl.u32 %v61, 7
    %v63 = vsub.s32 0, %v62
    %v64 = vrot.slane %v59, %v63
    %v70 = vunpack.c.l.b16 %v55
    %v71 = vunpack.c.l.b16 %v56
    %v72 = vunpack.c.l.b16 %v57
    %v73 = vunpack.c.l.b16 %v58
    %v74 = vpack.c.b16 %v71, %v70
    %v75 = vpack.c.b16 %v73, %v72
    %vm78 = vcmask 261120
    %v80 = vsel %vm78, %v54, 0
    %82 = vmatprep.subr.bf16.mxu0 0
    %83 = vmatpush1.bf16.msra.mxu0 0
    %84 = vmatprep.subr.bf16.mxu0 0
    %85 = vmatpush1.bf16.msra.mxu0 0
    %86 = vmatprep.subr.bf16.mxu0 0
    %87 = vmatpush1.bf16.msra.mxu0 0
    %88 = vmatprep.subr.bf16.mxu0 0
    %89 = vmatpush1.bf16.msra.mxu0 0
    %90 = vmatprep.subr.bf16.mxu0 0
    %91 = vmatpush1.bf16.msra.mxu0 0
    %92 = vmatprep.subr.bf16.mxu0 0
    %93 = vmatpush1.bf16.msra.mxu0 0
    %94 = vmatprep.subr.bf16.mxu0 0
    %95 = vmatpush1.bf16.msra.mxu0 %v75
    %96 = vmatprep.subr.bf16.mxu0 0
    %97 = vmatpush1.bf16.msra.mxu0 %v74
    %98 = vmatprep.subr.bf16.mxu0 0
    %99 = vmatpush2.bf16.msra.mxu0 0
    %100 = vmatprep.subr.bf16.mxu0 0
    %101 = vmatpush2.bf16.msra.mxu0 0
    %102 = vmatprep.subr.bf16.mxu0 0
    %103 = vmatpush2.bf16.msra.mxu0 0
    %104 = vmatprep.subr.bf16.mxu0 0
    %105 = vmatpush2.bf16.msra.mxu0 0
    %106 = vmatprep.subr.bf16.mxu0 0
    %107 = vmatpush2.bf16.msra.mxu0 0
    %108 = vmatprep.subr.bf16.mxu0 0
    %109 = vmatpush2.bf16.msra.mxu0 0
    %110 = vmatprep.subr.bf16.mxu0 0
    %111 = vmatpush2.bf16.msra.mxu0 0
    %112 = vmatprep.subr.bf16.mxu0 0
    %113 = vmatpush2.bf16.msra.mxu0 0
    %114 = vmatprep.mubr.bf16.mxu0 0
    %115 = vmatmul.mubr.bf16.gmra.mxu0 %v80
    %v116 = vpop.f32.mrf.mxu0
    %v117 = vadd.f32 %v64, %v116
    %v118 = vpop.f32.mrf.mxu0
    %v119 = vpop.f32.mrf.mxu0
    %v120 = vpop.f32.mrf.mxu0
    %121 = vdwg.mxu0
    %122 = vst [vmem:[#allocation2] sm:$0x3] %v117
    // Predicated region
    $region22: #{my_deit_forward.11} parent=1 // pred_check
      _
    $region23: #{my_deit_forward.11} parent=1 // pred_check_branch
      %124 = sbr.rel (0) target = $region25
    $region24: #{my_deit_forward.11} parent=1 // pred_region
      %s126 = ssub.s32 32, 32
      %127 = vsyncadd [#allocation3], %s126
      %s129 = sshll.u32 [#allocation2], 4
      %s130 = int_to_ptr.vmem [resolvable:$true] %s129
      %132 = dma.vmem_to_hbm [thread:$0]  %s130, 32, %s5, [#allocation3]
    $region25: #{my_deit_forward.11} parent=1 // pred_fallthru
      _
    // Predicated region
    $region26: #{my_deit_forward.11} parent=1 // pred_check
      _
    $region27: #{my_deit_forward.11} parent=1 // pred_check_branch
      %134 = sbr.rel (0) target = $region29
    $region28: #{my_deit_forward.11} parent=1 // pred_region
      %135 = dma.done [#allocation3], 32
    $region29: #{my_deit_forward.11} parent=1 // pred_fallthru
      _
    %136 = vsyncpa [#allocation3], 1

</llo_original>
